<compile_context>
chip_gen: v7x
topology: tpu7x:2x2x1
jax: 0.10.0
libtpu: 0.0.40
codegen_flags: <defaults>
</compile_context>

<pallas_src>
import functools

import jax
import jax.numpy as jnp
from jax.experimental import pallas as pl
from jax.experimental.pallas import tpu as pltpu


def _round_up(v, m):
    return ((v + m - 1) // m) * m


# ----------------------------- fused TemporalBlock kernel -----------------------------

def _fused_temporal_block_kernel(*refs, K, dil, Lp, has_ds):
    """One full TemporalBlock for a single batch row.

    refs (has_ds=True):  x, w1, b1, w2, b2, wd, bd, out, xpad_scratch, h1pad_scratch
    refs (has_ds=False): x, w1, b1, w2, b2,         out, xpad_scratch, h1pad_scratch

      x   : (1, Lp, Cip)        channel/length padded input (NLC)
      w1  : (K, Cip, Cop)       conv1 taps        b1: (1, Cop)
      w2  : (K, Cop, Cop)       conv2 taps        b2: (1, Cop)
      wd  : (Cip, Cop)          1x1 residual conv bd: (1, Cop)   (only if has_ds)
      out : (1, Lp, Cop)
      xpad_scratch  : (pad8 + Lp, Cip) VMEM   causal zero-history + input slab
      h1pad_scratch : (pad8 + Lp, Cop) VMEM   causal zero-history + conv1 output
    """
    if has_ds:
        (x_ref, w1_ref, b1_ref, w2_ref, b2_ref, wd_ref, bd_ref,
         o_ref, xpad_ref, h1pad_ref) = refs
    else:
        (x_ref, w1_ref, b1_ref, w2_ref, b2_ref,
         o_ref, xpad_ref, h1pad_ref) = refs

    Cin = x_ref.shape[2]
    Cout = w1_ref.shape[2]
    pad = (K - 1) * dil                      # causal history length (== PyTorch padding)
    pad8 = _round_up(pad, 8)                 # sublane-aligned history region
    base = pad8 - pad                        # first tap's read offset

    # --- stage the input into a causally zero-padded VMEM slab (all stores aligned).
    if pad8 > 0:
        xpad_ref[0:pad8, :] = jnp.zeros((pad8, Cin), dtype=x_ref.dtype)
        h1pad_ref[0:pad8, :] = jnp.zeros((pad8, Cout), dtype=x_ref.dtype)
    xpad_ref[pad8:pad8 + Lp, :] = x_ref[0]

    # --- conv1 (dilated, causal) + bias + ReLU.  Channels are 128-padded, so each
    #     of the K taps is a full-width lane-dense MXU matmul; f32 accumulation.
    acc1 = jnp.broadcast_to(b1_ref[...].astype(jnp.float32), (Lp, Cout))
    for k in range(K):
        off = base + k * dil
        acc1 = acc1 + jnp.dot(xpad_ref[off:off + Lp, :], w1_ref[k],
                              preferred_element_type=jnp.float32)
    h1 = jnp.maximum(acc1, 0.0)
    h1pad_ref[pad8:pad8 + Lp, :] = h1.astype(x_ref.dtype)

    # --- residual branch: 1x1 conv when the original in/out channel counts differ,
    #     identity otherwise.  Stays entirely in VMEM/vregs.
    if has_ds:
        res = (jnp.dot(x_ref[0], wd_ref[...], preferred_element_type=jnp.float32)
               + bd_ref[...].astype(jnp.float32))
    else:
        res = x_ref[0].astype(jnp.float32)

    # --- conv2 + bias + ReLU, then residual add + final ReLU (fused epilogue).
    acc2 = jnp.broadcast_to(b2_ref[...].astype(jnp.float32), (Lp, Cout))
    for k in range(K):
        off = base + k * dil
        acc2 = acc2 + jnp.dot(h1pad_ref[off:off + Lp, :], w2_ref[k],
                              preferred_element_type=jnp.float32)
    out = jnp.maximum(jnp.maximum(acc2, 0.0) + res, 0.0)
    o_ref[0] = out.astype(o_ref.dtype)


def temporal_block_fused(x, layer, *, kernel_size, dilation):
    """x: (N, Lp, Cip) padded NLC -> (N, Lp, Cop) padded NLC.  One pallas_call."""
    N, Lp, Cip = x.shape
    K = kernel_size
    Cop = layer["w1"].shape[2]
    pad8 = _round_up((K - 1) * dilation, 8)
    has_ds = layer["wd"] is not None
    if not has_ds:
        assert Cip == Cop, "identity residual requires matching padded channels"

    kern = functools.partial(_fused_temporal_block_kernel,
                             K=K, dil=dilation, Lp=Lp, has_ds=has_ds)

    # Activations: one batch row per grid step.  Weights/biases: constant index_map
    # -> fetched into VMEM once and kept resident for the whole grid.
    in_specs = [
        pl.BlockSpec((1, Lp, Cip), lambda n: (n, 0, 0)),
        pl.BlockSpec((K, Cip, Cop), lambda n: (0, 0, 0)),
        pl.BlockSpec((1, Cop), lambda n: (0, 0)),
        pl.BlockSpec((K, Cop, Cop), lambda n: (0, 0, 0)),
        pl.BlockSpec((1, Cop), lambda n: (0, 0)),
    ]
    args = [x, layer["w1"], layer["b1"], layer["w2"], layer["b2"]]
    if has_ds:
        in_specs += [pl.BlockSpec((Cip, Cop), lambda n: (0, 0)),
                     pl.BlockSpec((1, Cop), lambda n: (0, 0))]
        args += [layer["wd"], layer["bd"]]

    return pl.pallas_call(
        kern,
        out_shape=jax.ShapeDtypeStruct((N, Lp, Cop), x.dtype),
        grid=(N,),
        in_specs=in_specs,
        out_specs=pl.BlockSpec((1, Lp, Cop), lambda n: (n, 0, 0)),
        scratch_shapes=[
            pltpu.VMEM((pad8 + Lp, Cip), x.dtype),   # causal-padded input slab
            pltpu.VMEM((pad8 + Lp, Cop), x.dtype),   # causal-padded conv1 output
        ],
        compiler_params=pltpu.CompilerParams(
            dimension_semantics=("parallel",),        # batch steps -> both TCs on v7x
        ),
    )(*args)


# ----------------------------- parameter handling -----------------------------

def weight_norm_effective(v, g, eps=1e-12):
    # PyTorch weight_norm default dim=0: per-output-channel norm over (in, k).
    norm = jnp.sqrt(jnp.sum(v * v, axis=(1, 2), keepdims=True))
    return g[:, None, None] * v / jnp.maximum(norm, eps)


def init_tcn_params(key, num_inputs, num_channels, kernel_size):
    """Raw PyTorch-layout effective weights (weight_norm folded in)."""
    params = []
    for i, out_ch in enumerate(num_channels):
        in_ch = num_inputs if i == 0 else num_channels[i - 1]
        key, *ks = jax.random.split(key, 9)
        v1 = 0.01 * jax.random.normal(ks[0], (out_ch, in_ch, kernel_size), jnp.float32)
        g1 = 1.0 + 0.1 * jax.random.normal(ks[1], (out_ch,), jnp.float32)
        b1 = 0.1 * jax.random.normal(ks[2], (out_ch,), jnp.float32)
        v2 = 0.01 * jax.random.normal(ks[3], (out_ch, out_ch, kernel_size), jnp.float32)
        g2 = 1.0 + 0.1 * jax.random.normal(ks[4], (out_ch,), jnp.float32)
        b2 = 0.1 * jax.random.normal(ks[5], (out_ch,), jnp.float32)
        if in_ch != out_ch:
            wd = 0.01 * jax.random.normal(ks[6], (out_ch, in_ch, 1), jnp.float32)
            bd = 0.1 * jax.random.normal(ks[7], (out_ch,), jnp.float32)
        else:
            wd, bd = None, None
        params.append(dict(
            w1=weight_norm_effective(v1, g1), b1=b1,     # (O, I, K) PyTorch layout
            w2=weight_norm_effective(v2, g2), b2=b2,
            wd=wd, bd=bd, dilation=2 ** i,
        ))
    return params


def pack_params(raw_params, dtype):
    """Pad channels to multiples of 128 (lane-dense) and transpose to (K, Cin, Cout)."""
    packed = []
    for p in raw_params:
        O, I, K = p["w1"].shape
        Cip, Cop = _round_up(I, 128), _round_up(O, 128)
        w1 = jnp.zeros((K, Cip, Cop), dtype).at[:, :I, :O].set(
            jnp.transpose(p["w1"], (2, 1, 0)).astype(dtype))
        b1 = jnp.zeros((1, Cop), dtype).at[0, :O].set(p["b1"].astype(dtype))
        w2 = jnp.zeros((K, Cop, Cop), dtype).at[:, :O, :O].set(
            jnp.transpose(p["w2"], (2, 1, 0)).astype(dtype))
        b2 = jnp.zeros((1, Cop), dtype).at[0, :O].set(p["b2"].astype(dtype))
        if p["wd"] is not None:
            wd = jnp.zeros((Cip, Cop), dtype).at[:I, :O].set(
                jnp.transpose(p["wd"][:, :, 0], (1, 0)).astype(dtype))
            bd = jnp.zeros((1, Cop), dtype).at[0, :O].set(p["bd"].astype(dtype))
        else:
            wd, bd = None, None
        packed.append(dict(w1=w1, b1=b1, w2=w2, b2=b2, wd=wd, bd=bd))
    return packed


# ----------------------------- TCNEncoder forward -----------------------------

def tcn_encoder_forward(x_nlc, packed, *, kernel_size, out_channels):
    """TCNEncoder.forward: (N, L, C_in) -> (N, L, C_out).

    The PyTorch module transposes to NCL and back around the Conv1d stack; we keep
    NLC (channels on lanes) so the transposes vanish.  Dropout is identity (eval).
    """
    # TODO(synk): training-mode dropout is skipped (inference/eval semantics).
    N, L, Cin = x_nlc.shape
    dtype = packed[0]["w1"].dtype
    Lp = _round_up(L, 8)
    Cip = packed[0]["w1"].shape[1]
    h = jnp.zeros((N, Lp, Cip), dtype).at[:, :L, :Cin].set(x_nlc.astype(dtype))
    for i, layer in enumerate(packed):
        h = temporal_block_fused(h, layer, kernel_size=kernel_size, dilation=2 ** i)
    return h[:, :L, :out_channels].astype(jnp.float32)


# ----------------------------- pure-JAX f32 reference -----------------------------

def _ref_conv1d(x, w, b, dilation, padding):
    y = jax.lax.conv_general_dilated(
        x, w, window_strides=(1,), padding=[(padding, padding)],
        rhs_dilation=(dilation,), dimension_numbers=("NCH", "OIH", "NCH"))
    return y + b[None, :, None]


def _ref_block(x, p, kernel_size):
    dil = p["dilation"]
    pad = (kernel_size - 1) * dil
    h = jax.nn.relu(_ref_conv1d(x, p["w1"], p["b1"], dil, pad)[:, :, :-pad])
    h = jax.nn.relu(_ref_conv1d(h, p["w2"], p["b2"], dil, pad)[:, :, :-pad])
    res = x if p["wd"] is None else _ref_conv1d(x, p["wd"], p["bd"], 1, 0)
    return jax.nn.relu(h + res)


# ----------------------------- main -----------------------------

if __name__ == "__main__":
    # TCNEncoder config: input_size=4, hidden_sizes=[8, 8], kernel_size=3,
    # stride=1, dropout=0.2 (inactive at inference).
    N, L, C_IN = 2, 16, 4                  # (batch, seq_len, input_size)
    HIDDEN = [8, 8]
    KERNEL_SIZE = 3

    key = jax.random.PRNGKey(0)
    kx, kp = jax.random.split(key)
    x = jax.random.normal(kx, (N, L, C_IN), jnp.float32)
    raw = init_tcn_params(kp, C_IN, HIDDEN, KERNEL_SIZE)

    # pure-JAX f32 reference (mirrors the PyTorch NCL module exactly)
    ref_ncl = jnp.transpose(x, (0, 2, 1))
    for p in raw:
        ref_ncl = _ref_block(ref_ncl, p, KERNEL_SIZE)
    ref = jnp.transpose(ref_ncl, (0, 2, 1))

    fwd = jax.jit(tcn_encoder_forward, static_argnames=("kernel_size", "out_channels"))

    # f32 path: matches module semantics tightly.
    out32 = jax.block_until_ready(
        fwd(x, pack_params(raw, jnp.float32),
            kernel_size=KERNEL_SIZE, out_channels=HIDDEN[-1]))
    assert out32.shape == (N, L, HIDDEN[-1]), out32.shape
    assert jnp.allclose(out32, ref, atol=1e-4, rtol=1e-4), "f32 mismatch vs reference"

    # bf16 I/O path (f32 accumulation in-kernel): halves HBM/VMEM traffic.
    out16 = jax.block_until_ready(
        fwd(x, pack_params(raw, jnp.bfloat16),
            kernel_size=KERNEL_SIZE, out_channels=HIDDEN[-1]))
    assert jnp.allclose(out16, ref, atol=3e-2, rtol=3e-2), "bf16 mismatch vs reference"

    print("KERNEL_OK")
</pallas_src>

<mosaic_0001>
module attributes {stable_mosaic.version = 11 : i64} {
  func.func @_fused_temporal_block_kernel(%arg0: i32, %arg1: memref<1x16x128xf32, #tpu.memory_space<vmem>>, %arg2: memref<3x128x128xf32, #tpu.memory_space<vmem>>, %arg3: memref<1x128xf32, #tpu.memory_space<vmem>>, %arg4: memref<3x128x128xf32, #tpu.memory_space<vmem>>, %arg5: memref<1x128xf32, #tpu.memory_space<vmem>>, %arg6: memref<128x128xf32, #tpu.memory_space<vmem>>, %arg7: memref<1x128xf32, #tpu.memory_space<vmem>>, %arg8: memref<1x16x128xf32, #tpu.memory_space<vmem>>, %arg9: memref<24x128xf32, #tpu.memory_space<vmem>>, %arg10: memref<24x128xf32, #tpu.memory_space<vmem>>) attributes {dimension_semantics = [#tpu.dimension_semantics<parallel>], iteration_bounds = array<i64: 2>, scalar_prefetch = 0 : i64, scratch_operands = 2 : i64, tpu.core_type = #tpu.core_type<tc>, window_params = [{transform_indices = @transform_0, window_bounds = array<i64: 1, 16, 128>}, {pipeline_mode = #tpu.pipeline_mode<synchronous>, transform_indices = @transform_1, window_bounds = array<i64: 3, 128, 128>}, {pipeline_mode = #tpu.pipeline_mode<synchronous>, transform_indices = @transform_2, window_bounds = array<i64: 1, 128>}, {pipeline_mode = #tpu.pipeline_mode<synchronous>, transform_indices = @transform_3, window_bounds = array<i64: 3, 128, 128>}, {pipeline_mode = #tpu.pipeline_mode<synchronous>, transform_indices = @transform_4, window_bounds = array<i64: 1, 128>}, {pipeline_mode = #tpu.pipeline_mode<synchronous>, transform_indices = @transform_5, window_bounds = array<i64: 128, 128>}, {pipeline_mode = #tpu.pipeline_mode<synchronous>, transform_indices = @transform_6, window_bounds = array<i64: 1, 128>}, {transform_indices = @transform_7, window_bounds = array<i64: 1, 16, 128>}]} {
    %cst = arith.constant 0.000000e+00 : f32
    %0 = vector.broadcast %cst : f32 to vector<8x128xf32>
    %c0 = arith.constant 0 : index
    %c0_0 = arith.constant 0 : index
    %1 = vector.load %arg9[%c0, %c0_0] : memref<24x128xf32, #tpu.memory_space<vmem>>, vector<8x128xf32>
    tpu.vector_store %arg9[%c0, %c0_0], %0 {strides = array<i32>} : memref<24x128xf32, #tpu.memory_space<vmem>>, vector<8x128xf32>,
    %cst_1 = arith.constant 0.000000e+00 : f32
    %2 = vector.broadcast %cst_1 : f32 to vector<8x128xf32>
    %c0_2 = arith.constant 0 : index
    %c0_3 = arith.constant 0 : index
    %3 = vector.load %arg10[%c0_2, %c0_3] : memref<24x128xf32, #tpu.memory_space<vmem>>, vector<8x128xf32>
    tpu.vector_store %arg10[%c0_2, %c0_3], %2 {strides = array<i32>} : memref<24x128xf32, #tpu.memory_space<vmem>>, vector<8x128xf32>,
    %c0_4 = arith.constant 0 : index
    %c0_5 = arith.constant 0 : index
    %c0_6 = arith.constant 0 : index
    %4 = vector.load %arg1[%c0_4, %c0_5, %c0_6] : memref<1x16x128xf32, #tpu.memory_space<vmem>>, vector<1x16x128xf32>
    %5 = vector.shape_cast %4 : vector<1x16x128xf32> to vector<16x128xf32>
    %c8 = arith.constant 8 : index
    %c0_7 = arith.constant 0 : index
    %6 = vector.load %arg9[%c8, %c0_7] : memref<24x128xf32, #tpu.memory_space<vmem>>, vector<16x128xf32>
    tpu.vector_store %arg9[%c8, %c0_7], %5 {strides = array<i32>} : memref<24x128xf32, #tpu.memory_space<vmem>>, vector<16x128xf32>,
    %c0_8 = arith.constant 0 : index
    %c0_9 = arith.constant 0 : index
    %7 = vector.load %arg3[%c0_8, %c0_9] : memref<1x128xf32, #tpu.memory_space<vmem>>, vector<1x128xf32>
    %8 = vector.shape_cast %7 : vector<1x128xf32> to vector<1x128xf32>
    %9 = vector.broadcast %8 : vector<1x128xf32> to vector<16x128xf32>
    %c6 = arith.constant 6 : index
    %c0_10 = arith.constant 0 : index
    %10 = vector.load %arg9[%c6, %c0_10] : memref<24x128xf32, #tpu.memory_space<vmem>>, vector<16x128xf32>
    %c0_11 = arith.constant 0 : index
    %c0_12 = arith.constant 0 : index
    %c0_13 = arith.constant 0 : index
    %11 = vector.load %arg2[%c0_11, %c0_12, %c0_13] : memref<3x128x128xf32, #tpu.memory_space<vmem>>, vector<1x128x128xf32>
    %12 = vector.shape_cast %11 : vector<1x128x128xf32> to vector<128x128xf32>
    %cst_14 = arith.constant dense<0.000000e+00> : vector<16x128xf32>
    %13 = tpu.matmul %10, %12, %cst_14 {dimension_numbers = #tpu.dot_dimension_numbers<[1], [0], [0], [1], [0, 0, 1, 1], [], []>} : vector<16x128xf32>, vector<128x128xf32>, vector<16x128xf32> -> vector<16x128xf32>
    %14 = arith.addf %9, %13 : vector<16x128xf32>
    %c7 = arith.constant 7 : index
    %c0_15 = arith.constant 0 : index
    %15 = vector.load %arg9[%c7, %c0_15] : memref<24x128xf32, #tpu.memory_space<vmem>>, vector<16x128xf32>
    %c1 = arith.constant 1 : index
    %c0_16 = arith.constant 0 : index
    %c0_17 = arith.constant 0 : index
    %16 = vector.load %arg2[%c1, %c0_16, %c0_17] : memref<3x128x128xf32, #tpu.memory_space<vmem>>, vector<1x128x128xf32>
    %17 = vector.shape_cast %16 : vector<1x128x128xf32> to vector<128x128xf32>
    %cst_18 = arith.constant dense<0.000000e+00> : vector<16x128xf32>
    %18 = tpu.matmul %15, %17, %cst_18 {dimension_numbers = #tpu.dot_dimension_numbers<[1], [0], [0], [1], [0, 0, 1, 1], [], []>} : vector<16x128xf32>, vector<128x128xf32>, vector<16x128xf32> -> vector<16x128xf32>
    %19 = arith.addf %14, %18 : vector<16x128xf32>
    %c8_19 = arith.constant 8 : index
    %c0_20 = arith.constant 0 : index
    %20 = vector.load %arg9[%c8_19, %c0_20] : memref<24x128xf32, #tpu.memory_space<vmem>>, vector<16x128xf32>
    %c2 = arith.constant 2 : index
    %c0_21 = arith.constant 0 : index
    %c0_22 = arith.constant 0 : index
    %21 = vector.load %arg2[%c2, %c0_21, %c0_22] : memref<3x128x128xf32, #tpu.memory_space<vmem>>, vector<1x128x128xf32>
    %22 = vector.shape_cast %21 : vector<1x128x128xf32> to vector<128x128xf32>
    %cst_23 = arith.constant dense<0.000000e+00> : vector<16x128xf32>
    %23 = tpu.matmul %20, %22, %cst_23 {dimension_numbers = #tpu.dot_dimension_numbers<[1], [0], [0], [1], [0, 0, 1, 1], [], []>} : vector<16x128xf32>, vector<128x128xf32>, vector<16x128xf32> -> vector<16x128xf32>
    %24 = arith.addf %19, %23 : vector<16x128xf32>
    %cst_24 = arith.constant 0.000000e+00 : f32
    %25 = vector.broadcast %cst_24 : f32 to vector<16x128xf32>
    %26 = arith.maximumf %24, %25 : vector<16x128xf32>
    %c8_25 = arith.constant 8 : index
    %c0_26 = arith.constant 0 : index
    %27 = vector.load %arg10[%c8_25, %c0_26] : memref<24x128xf32, #tpu.memory_space<vmem>>, vector<16x128xf32>
    tpu.vector_store %arg10[%c8_25, %c0_26], %26 {strides = array<i32>} : memref<24x128xf32, #tpu.memory_space<vmem>>, vector<16x128xf32>,
    %c0_27 = arith.constant 0 : index
    %c0_28 = arith.constant 0 : index
    %c0_29 = arith.constant 0 : index
    %28 = vector.load %arg1[%c0_27, %c0_28, %c0_29] : memref<1x16x128xf32, #tpu.memory_space<vmem>>, vector<1x16x128xf32>
    %29 = vector.shape_cast %28 : vector<1x16x128xf32> to vector<16x128xf32>
    %c0_30 = arith.constant 0 : index
    %c0_31 = arith.constant 0 : index
    %30 = vector.load %arg6[%c0_30, %c0_31] : memref<128x128xf32, #tpu.memory_space<vmem>>, vector<128x128xf32>
    %cst_32 = arith.constant dense<0.000000e+00> : vector<16x128xf32>
    %31 = tpu.matmul %29, %30, %cst_32 {dimension_numbers = #tpu.dot_dimension_numbers<[1], [0], [0], [1], [0, 0, 1, 1], [], []>} : vector<16x128xf32>, vector<128x128xf32>, vector<16x128xf32> -> vector<16x128xf32>
    %c0_33 = arith.constant 0 : index
    %c0_34 = arith.constant 0 : index
    %32 = vector.load %arg7[%c0_33, %c0_34] : memref<1x128xf32, #tpu.memory_space<vmem>>, vector<1x128xf32>
    %33 = vector.broadcast %32 : vector<1x128xf32> to vector<16x128xf32>
    %34 = arith.addf %31, %33 : vector<16x128xf32>
    %c0_35 = arith.constant 0 : index
    %c0_36 = arith.constant 0 : index
    %35 = vector.load %arg5[%c0_35, %c0_36] : memref<1x128xf32, #tpu.memory_space<vmem>>, vector<1x128xf32>
    %36 = vector.shape_cast %35 : vector<1x128xf32> to vector<1x128xf32>
    %37 = vector.broadcast %36 : vector<1x128xf32> to vector<16x128xf32>
    %c6_37 = arith.constant 6 : index
    %c0_38 = arith.constant 0 : index
    %38 = vector.load %arg10[%c6_37, %c0_38] : memref<24x128xf32, #tpu.memory_space<vmem>>, vector<16x128xf32>
    %c0_39 = arith.constant 0 : index
    %c0_40 = arith.constant 0 : index
    %c0_41 = arith.constant 0 : index
    %39 = vector.load %arg4[%c0_39, %c0_40, %c0_41] : memref<3x128x128xf32, #tpu.memory_space<vmem>>, vector<1x128x128xf32>
    %40 = vector.shape_cast %39 : vector<1x128x128xf32> to vector<128x128xf32>
    %cst_42 = arith.constant dense<0.000000e+00> : vector<16x128xf32>
    %41 = tpu.matmul %38, %40, %cst_42 {dimension_numbers = #tpu.dot_dimension_numbers<[1], [0], [0], [1], [0, 0, 1, 1], [], []>} : vector<16x128xf32>, vector<128x128xf32>, vector<16x128xf32> -> vector<16x128xf32>
    %42 = arith.addf %37, %41 : vector<16x128xf32>
    %c7_43 = arith.constant 7 : index
    %c0_44 = arith.constant 0 : index
    %43 = vector.load %arg10[%c7_43, %c0_44] : memref<24x128xf32, #tpu.memory_space<vmem>>, vector<16x128xf32>
    %c1_45 = arith.constant 1 : index
    %c0_46 = arith.constant 0 : index
    %c0_47 = arith.constant 0 : index
    %44 = vector.load %arg4[%c1_45, %c0_46, %c0_47] : memref<3x128x128xf32, #tpu.memory_space<vmem>>, vector<1x128x128xf32>
    %45 = vector.shape_cast %44 : vector<1x128x128xf32> to vector<128x128xf32>
    %cst_48 = arith.constant dense<0.000000e+00> : vector<16x128xf32>
    %46 = tpu.matmul %43, %45, %cst_48 {dimension_numbers = #tpu.dot_dimension_numbers<[1], [0], [0], [1], [0, 0, 1, 1], [], []>} : vector<16x128xf32>, vector<128x128xf32>, vector<16x128xf32> -> vector<16x128xf32>
    %47 = arith.addf %42, %46 : vector<16x128xf32>
    %c8_49 = arith.constant 8 : index
    %c0_50 = arith.constant 0 : index
    %48 = vector.load %arg10[%c8_49, %c0_50] : memref<24x128xf32, #tpu.memory_space<vmem>>, vector<16x128xf32>
    %c2_51 = arith.constant 2 : index
    %c0_52 = arith.constant 0 : index
    %c0_53 = arith.constant 0 : index
    %49 = vector.load %arg4[%c2_51, %c0_52, %c0_53] : memref<3x128x128xf32, #tpu.memory_space<vmem>>, vector<1x128x128xf32>
    %50 = vector.shape_cast %49 : vector<1x128x128xf32> to vector<128x128xf32>
    %cst_54 = arith.constant dense<0.000000e+00> : vector<16x128xf32>
    %51 = tpu.matmul %48, %50, %cst_54 {dimension_numbers = #tpu.dot_dimension_numbers<[1], [0], [0], [1], [0, 0, 1, 1], [], []>} : vector<16x128xf32>, vector<128x128xf32>, vector<16x128xf32> -> vector<16x128xf32>
    %52 = arith.addf %47, %51 : vector<16x128xf32>
    %cst_55 = arith.constant 0.000000e+00 : f32
    %53 = vector.broadcast %cst_55 : f32 to vector<16x128xf32>
    %54 = arith.maximumf %52, %53 : vector<16x128xf32>
    %55 = arith.addf %54, %34 : vector<16x128xf32>
    %cst_56 = arith.constant 0.000000e+00 : f32
    %56 = vector.broadcast %cst_56 : f32 to vector<16x128xf32>
    %57 = arith.maximumf %55, %56 : vector<16x128xf32>
    %c0_57 = arith.constant 0 : index
    %c0_58 = arith.constant 0 : index
    %c0_59 = arith.constant 0 : index
    %58 = vector.load %arg8[%c0_57, %c0_58, %c0_59] : memref<1x16x128xf32, #tpu.memory_space<vmem>>, vector<1x16x128xf32>
    %59 = vector.shape_cast %58 : vector<1x16x128xf32> to vector<16x128xf32>
    %60 = vector.shape_cast %57 : vector<16x128xf32> to vector<1x16x128xf32>
    tpu.vector_store %arg8[%c0_57, %c0_58, %c0_59], %60 {strides = array<i32>} : memref<1x16x128xf32, #tpu.memory_space<vmem>>, vector<1x16x128xf32>,
    return
  }
  func.func @transform_0(%arg0: i32) -> (i32, i32, i32) {
    %c0_i32 = arith.constant 0 : i32
    %c0_i32_0 = arith.constant 0 : i32
    %c0_i32_1 = arith.constant 0 : i32
    return %arg0, %c0_i32, %c0_i32_0 : i32, i32, i32
  }
  func.func @transform_1(%arg0: i32) -> (i32, i32, i32) {
    %c0_i32 = arith.constant 0 : i32
    %c0_i32_0 = arith.constant 0 : i32
    %c0_i32_1 = arith.constant 0 : i32
    %c0_i32_2 = arith.constant 0 : i32
    return %c0_i32, %c0_i32_0, %c0_i32_1 : i32, i32, i32
  }
  func.func @transform_2(%arg0: i32) -> (i32, i32) {
    %c0_i32 = arith.constant 0 : i32
    %c0_i32_0 = arith.constant 0 : i32
    %c0_i32_1 = arith.constant 0 : i32
    return %c0_i32, %c0_i32_0 : i32, i32
  }
  func.func @transform_3(%arg0: i32) -> (i32, i32, i32) {
    %c0_i32 = arith.constant 0 : i32
    %c0_i32_0 = arith.constant 0 : i32
    %c0_i32_1 = arith.constant 0 : i32
    %c0_i32_2 = arith.constant 0 : i32
    return %c0_i32, %c0_i32_0, %c0_i32_1 : i32, i32, i32
  }
  func.func @transform_4(%arg0: i32) -> (i32, i32) {
    %c0_i32 = arith.constant 0 : i32
    %c0_i32_0 = arith.constant 0 : i32
    %c0_i32_1 = arith.constant 0 : i32
    return %c0_i32, %c0_i32_0 : i32, i32
  }
  func.func @transform_5(%arg0: i32) -> (i32, i32) {
    %c0_i32 = arith.constant 0 : i32
    %c0_i32_0 = arith.constant 0 : i32
    %c0_i32_1 = arith.constant 0 : i32
    return %c0_i32, %c0_i32_0 : i32, i32
  }
  func.func @transform_6(%arg0: i32) -> (i32, i32) {
    %c0_i32 = arith.constant 0 : i32
    %c0_i32_0 = arith.constant 0 : i32
    %c0_i32_1 = arith.constant 0 : i32
    return %c0_i32, %c0_i32_0 : i32, i32
  }
  func.func @transform_7(%arg0: i32) -> (i32, i32, i32) {
    %c0_i32 = arith.constant 0 : i32
    %c0_i32_0 = arith.constant 0 : i32
    %c0_i32_1 = arith.constant 0 : i32
    return %arg0, %c0_i32, %c0_i32_0 : i32, i32, i32
  }
}

module attributes {stable_mosaic.version = 11 : i64} {
  func.func @_fused_temporal_block_kernel(%arg0: i32, %arg1: memref<1x16x128xf32, #tpu.memory_space<vmem>>, %arg2: memref<3x128x128xf32, #tpu.memory_space<vmem>>, %arg3: memref<1x128xf32, #tpu.memory_space<vmem>>, %arg4: memref<3x128x128xf32, #tpu.memory_space<vmem>>, %arg5: memref<1x128xf32, #tpu.memory_space<vmem>>, %arg6: memref<1x16x128xf32, #tpu.memory_space<vmem>>, %arg7: memref<24x128xf32, #tpu.memory_space<vmem>>, %arg8: memref<24x128xf32, #tpu.memory_space<vmem>>) attributes {dimension_semantics = [#tpu.dimension_semantics<parallel>], iteration_bounds = array<i64: 2>, scalar_prefetch = 0 : i64, scratch_operands = 2 : i64, tpu.core_type = #tpu.core_type<tc>, window_params = [{transform_indices = @transform_0, window_bounds = array<i64: 1, 16, 128>}, {pipeline_mode = #tpu.pipeline_mode<synchronous>, transform_indices = @transform_1, window_bounds = array<i64: 3, 128, 128>}, {pipeline_mode = #tpu.pipeline_mode<synchronous>, transform_indices = @transform_2, window_bounds = array<i64: 1, 128>}, {pipeline_mode = #tpu.pipeline_mode<synchronous>, transform_indices = @transform_3, window_bounds = array<i64: 3, 128, 128>}, {pipeline_mode = #tpu.pipeline_mode<synchronous>, transform_indices = @transform_4, window_bounds = array<i64: 1, 128>}, {transform_indices = @transform_5, window_bounds = array<i64: 1, 16, 128>}]} {
    %cst = arith.constant 0.000000e+00 : f32
    %0 = vector.broadcast %cst : f32 to vector<8x128xf32>
    %c0 = arith.constant 0 : index
    %c0_0 = arith.constant 0 : index
    %1 = vector.load %arg7[%c0, %c0_0] : memref<24x128xf32, #tpu.memory_space<vmem>>, vector<8x128xf32>
    tpu.vector_store %arg7[%c0, %c0_0], %0 {strides = array<i32>} : memref<24x128xf32, #tpu.memory_space<vmem>>, vector<8x128xf32>,
    %cst_1 = arith.constant 0.000000e+00 : f32
    %2 = vector.broadcast %cst_1 : f32 to vector<8x128xf32>
    %c0_2 = arith.constant 0 : index
    %c0_3 = arith.constant 0 : index
    %3 = vector.load %arg8[%c0_2, %c0_3] : memref<24x128xf32, #tpu.memory_space<vmem>>, vector<8x128xf32>
    tpu.vector_store %arg8[%c0_2, %c0_3], %2 {strides = array<i32>} : memref<24x128xf32, #tpu.memory_space<vmem>>, vector<8x128xf32>,
    %c0_4 = arith.constant 0 : index
    %c0_5 = arith.constant 0 : index
    %c0_6 = arith.constant 0 : index
    %4 = vector.load %arg1[%c0_4, %c0_5, %c0_6] : memref<1x16x128xf32, #tpu.memory_space<vmem>>, vector<1x16x128xf32>
    %5 = vector.shape_cast %4 : vector<1x16x128xf32> to vector<16x128xf32>
    %c8 = arith.constant 8 : index
    %c0_7 = arith.constant 0 : index
    %6 = vector.load %arg7[%c8, %c0_7] : memref<24x128xf32, #tpu.memory_space<vmem>>, vector<16x128xf32>
    tpu.vector_store %arg7[%c8, %c0_7], %5 {strides = array<i32>} : memref<24x128xf32, #tpu.memory_space<vmem>>, vector<16x128xf32>,
    %c0_8 = arith.constant 0 : index
    %c0_9 = arith.constant 0 : index
    %7 = vector.load %arg3[%c0_8, %c0_9] : memref<1x128xf32, #tpu.memory_space<vmem>>, vector<1x128xf32>
    %8 = vector.shape_cast %7 : vector<1x128xf32> to vector<1x128xf32>
    %9 = vector.broadcast %8 : vector<1x128xf32> to vector<16x128xf32>
    %c4 = arith.constant 4 : index
    %c0_10 = arith.constant 0 : index
    %10 = vector.load %arg7[%c4, %c0_10] : memref<24x128xf32, #tpu.memory_space<vmem>>, vector<16x128xf32>
    %c0_11 = arith.constant 0 : index
    %c0_12 = arith.constant 0 : index
    %c0_13 = arith.constant 0 : index
    %11 = vector.load %arg2[%c0_11, %c0_12, %c0_13] : memref<3x128x128xf32, #tpu.memory_space<vmem>>, vector<1x128x128xf32>
    %12 = vector.shape_cast %11 : vector<1x128x128xf32> to vector<128x128xf32>
    %cst_14 = arith.constant dense<0.000000e+00> : vector<16x128xf32>
    %13 = tpu.matmul %10, %12, %cst_14 {dimension_numbers = #tpu.dot_dimension_numbers<[1], [0], [0], [1], [0, 0, 1, 1], [], []>} : vector<16x128xf32>, vector<128x128xf32>, vector<16x128xf32> -> vector<16x128xf32>
    %14 = arith.addf %9, %13 : vector<16x128xf32>
    %c6 = arith.constant 6 : index
    %c0_15 = arith.constant 0 : index
    %15 = vector.load %arg7[%c6, %c0_15] : memref<24x128xf32, #tpu.memory_space<vmem>>, vector<16x128xf32>
    %c1 = arith.constant 1 : index
    %c0_16 = arith.constant 0 : index
    %c0_17 = arith.constant 0 : index
    %16 = vector.load %arg2[%c1, %c0_16, %c0_17] : memref<3x128x128xf32, #tpu.memory_space<vmem>>, vector<1x128x128xf32>
    %17 = vector.shape_cast %16 : vector<1x128x128xf32> to vector<128x128xf32>
    %cst_18 = arith.constant dense<0.000000e+00> : vector<16x128xf32>
    %18 = tpu.matmul %15, %17, %cst_18 {dimension_numbers = #tpu.dot_dimension_numbers<[1], [0], [0], [1], [0, 0, 1, 1], [], []>} : vector<16x128xf32>, vector<128x128xf32>, vector<16x128xf32> -> vector<16x128xf32>
    %19 = arith.addf %14, %18 : vector<16x128xf32>
    %c8_19 = arith.constant 8 : index
    %c0_20 = arith.constant 0 : index
    %20 = vector.load %arg7[%c8_19, %c0_20] : memref<24x128xf32, #tpu.memory_space<vmem>>, vector<16x128xf32>
    %c2 = arith.constant 2 : index
    %c0_21 = arith.constant 0 : index
    %c0_22 = arith.constant 0 : index
    %21 = vector.load %arg2[%c2, %c0_21, %c0_22] : memref<3x128x128xf32, #tpu.memory_space<vmem>>, vector<1x128x128xf32>
    %22 = vector.shape_cast %21 : vector<1x128x128xf32> to vector<128x128xf32>
    %cst_23 = arith.constant dense<0.000000e+00> : vector<16x128xf32>
    %23 = tpu.matmul %20, %22, %cst_23 {dimension_numbers = #tpu.dot_dimension_numbers<[1], [0], [0], [1], [0, 0, 1, 1], [], []>} : vector<16x128xf32>, vector<128x128xf32>, vector<16x128xf32> -> vector<16x128xf32>
    %24 = arith.addf %19, %23 : vector<16x128xf32>
    %cst_24 = arith.constant 0.000000e+00 : f32
    %25 = vector.broadcast %cst_24 : f32 to vector<16x128xf32>
    %26 = arith.maximumf %24, %25 : vector<16x128xf32>
    %c8_25 = arith.constant 8 : index
    %c0_26 = arith.constant 0 : index
    %27 = vector.load %arg8[%c8_25, %c0_26] : memref<24x128xf32, #tpu.memory_space<vmem>>, vector<16x128xf32>
    tpu.vector_store %arg8[%c8_25, %c0_26], %26 {strides = array<i32>} : memref<24x128xf32, #tpu.memory_space<vmem>>, vector<16x128xf32>,
    %c0_27 = arith.constant 0 : index
    %c0_28 = arith.constant 0 : index
    %c0_29 = arith.constant 0 : index
    %28 = vector.load %arg1[%c0_27, %c0_28, %c0_29] : memref<1x16x128xf32, #tpu.memory_space<vmem>>, vector<1x16x128xf32>
    %29 = vector.shape_cast %28 : vector<1x16x128xf32> to vector<16x128xf32>
    %c0_30 = arith.constant 0 : index
    %c0_31 = arith.constant 0 : index
    %30 = vector.load %arg5[%c0_30, %c0_31] : memref<1x128xf32, #tpu.memory_space<vmem>>, vector<1x128xf32>
    %31 = vector.shape_cast %30 : vector<1x128xf32> to vector<1x128xf32>
    %32 = vector.broadcast %31 : vector<1x128xf32> to vector<16x128xf32>
    %c4_32 = arith.constant 4 : index
    %c0_33 = arith.constant 0 : index
    %33 = vector.load %arg8[%c4_32, %c0_33] : memref<24x128xf32, #tpu.memory_space<vmem>>, vector<16x128xf32>
    %c0_34 = arith.constant 0 : index
    %c0_35 = arith.constant 0 : index
    %c0_36 = arith.constant 0 : index
    %34 = vector.load %arg4[%c0_34, %c0_35, %c0_36] : memref<3x128x128xf32, #tpu.memory_space<vmem>>, vector<1x128x128xf32>
    %35 = vector.shape_cast %34 : vector<1x128x128xf32> to vector<128x128xf32>
    %cst_37 = arith.constant dense<0.000000e+00> : vector<16x128xf32>
    %36 = tpu.matmul %33, %35, %cst_37 {dimension_numbers = #tpu.dot_dimension_numbers<[1], [0], [0], [1], [0, 0, 1, 1], [], []>} : vector<16x128xf32>, vector<128x128xf32>, vector<16x128xf32> -> vector<16x128xf32>
    %37 = arith.addf %32, %36 : vector<16x128xf32>
    %c6_38 = arith.constant 6 : index
    %c0_39 = arith.constant 0 : index
    %38 = vector.load %arg8[%c6_38, %c0_39] : memref<24x128xf32, #tpu.memory_space<vmem>>, vector<16x128xf32>
    %c1_40 = arith.constant 1 : index
    %c0_41 = arith.constant 0 : index
    %c0_42 = arith.constant 0 : index
    %39 = vector.load %arg4[%c1_40, %c0_41, %c0_42] : memref<3x128x128xf32, #tpu.memory_space<vmem>>, vector<1x128x128xf32>
    %40 = vector.shape_cast %39 : vector<1x128x128xf32> to vector<128x128xf32>
    %cst_43 = arith.constant dense<0.000000e+00> : vector<16x128xf32>
    %41 = tpu.matmul %38, %40, %cst_43 {dimension_numbers = #tpu.dot_dimension_numbers<[1], [0], [0], [1], [0, 0, 1, 1], [], []>} : vector<16x128xf32>, vector<128x128xf32>, vector<16x128xf32> -> vector<16x128xf32>
    %42 = arith.addf %37, %41 : vector<16x128xf32>
    %c8_44 = arith.constant 8 : index
    %c0_45 = arith.constant 0 : index
    %43 = vector.load %arg8[%c8_44, %c0_45] : memref<24x128xf32, #tpu.memory_space<vmem>>, vector<16x128xf32>
    %c2_46 = arith.constant 2 : index
    %c0_47 = arith.constant 0 : index
    %c0_48 = arith.constant 0 : index
    %44 = vector.load %arg4[%c2_46, %c0_47, %c0_48] : memref<3x128x128xf32, #tpu.memory_space<vmem>>, vector<1x128x128xf32>
    %45 = vector.shape_cast %44 : vector<1x128x128xf32> to vector<128x128xf32>
    %cst_49 = arith.constant dense<0.000000e+00> : vector<16x128xf32>
    %46 = tpu.matmul %43, %45, %cst_49 {dimension_numbers = #tpu.dot_dimension_numbers<[1], [0], [0], [1], [0, 0, 1, 1], [], []>} : vector<16x128xf32>, vector<128x128xf32>, vector<16x128xf32> -> vector<16x128xf32>
    %47 = arith.addf %42, %46 : vector<16x128xf32>
    %cst_50 = arith.constant 0.000000e+00 : f32
    %48 = vector.broadcast %cst_50 : f32 to vector<16x128xf32>
    %49 = arith.maximumf %47, %48 : vector<16x128xf32>
    %50 = arith.addf %49, %29 : vector<16x128xf32>
    %cst_51 = arith.constant 0.000000e+00 : f32
    %51 = vector.broadcast %cst_51 : f32 to vector<16x128xf32>
    %52 = arith.maximumf %50, %51 : vector<16x128xf32>
    %c0_52 = arith.constant 0 : index
    %c0_53 = arith.constant 0 : index
    %c0_54 = arith.constant 0 : index
    %53 = vector.load %arg6[%c0_52, %c0_53, %c0_54] : memref<1x16x128xf32, #tpu.memory_space<vmem>>, vector<1x16x128xf32>
    %54 = vector.shape_cast %53 : vector<1x16x128xf32> to vector<16x128xf32>
    %55 = vector.shape_cast %52 : vector<16x128xf32> to vector<1x16x128xf32>
    tpu.vector_store %arg6[%c0_52, %c0_53, %c0_54], %55 {strides = array<i32>} : memref<1x16x128xf32, #tpu.memory_space<vmem>>, vector<1x16x128xf32>,
    return
  }
  func.func @transform_0(%arg0: i32) -> (i32, i32, i32) {
    %c0_i32 = arith.constant 0 : i32
    %c0_i32_0 = arith.constant 0 : i32
    %c0_i32_1 = arith.constant 0 : i32
    return %arg0, %c0_i32, %c0_i32_0 : i32, i32, i32
  }
  func.func @transform_1(%arg0: i32) -> (i32, i32, i32) {
    %c0_i32 = arith.constant 0 : i32
    %c0_i32_0 = arith.constant 0 : i32
    %c0_i32_1 = arith.constant 0 : i32
    %c0_i32_2 = arith.constant 0 : i32
    return %c0_i32, %c0_i32_0, %c0_i32_1 : i32, i32, i32
  }
  func.func @transform_2(%arg0: i32) -> (i32, i32) {
    %c0_i32 = arith.constant 0 : i32
    %c0_i32_0 = arith.constant 0 : i32
    %c0_i32_1 = arith.constant 0 : i32
    return %c0_i32, %c0_i32_0 : i32, i32
  }
  func.func @transform_3(%arg0: i32) -> (i32, i32, i32) {
    %c0_i32 = arith.constant 0 : i32
    %c0_i32_0 = arith.constant 0 : i32
    %c0_i32_1 = arith.constant 0 : i32
    %c0_i32_2 = arith.constant 0 : i32
    return %c0_i32, %c0_i32_0, %c0_i32_1 : i32, i32, i32
  }
  func.func @transform_4(%arg0: i32) -> (i32, i32) {
    %c0_i32 = arith.constant 0 : i32
    %c0_i32_0 = arith.constant 0 : i32
    %c0_i32_1 = arith.constant 0 : i32
    return %c0_i32, %c0_i32_0 : i32, i32
  }
  func.func @transform_5(%arg0: i32) -> (i32, i32, i32) {
    %c0_i32 = arith.constant 0 : i32
    %c0_i32_0 = arith.constant 0 : i32
    %c0_i32_1 = arith.constant 0 : i32
    return %arg0, %c0_i32, %c0_i32_0 : i32, i32, i32
  }
}

</mosaic_0001>

<llo_original>
// kernel: tcn_encoder_forward.3
$region0: #{tcn_encoder_forward.3}
  #allocation0 [shape = 'u32[]', space=smem, size = 0x4, offset = 0x4, fixed_abs, tag = 'smem constant byte address 0x4 - core index']
  #allocation1 [shape = 'u32[144,128]{1,0:T(1,128)}', space=vmem, size = 0x12000, scoped, tag = 'internal scratch']
  #allocation2 [shape = 'f32[24,128]{1,0:T(8,128)}', space=vmem, size = 0x3000, scoped, tag = 'scratch operand']
  #allocation3 [shape = 'f32[24,128]{1,0:T(8,128)}', space=vmem, size = 0x3000, scoped, tag = 'scratch operand']
  %s0 = inlined_call_operand.vmem [shape: f32[2,16,128], index: 0, kind: input, shape index: {}]
  %s1 = inlined_call_operand.vmem [shape: f32[3,128,128], index: 1, kind: input, shape index: {}]
  %s2 = inlined_call_operand.vmem [shape: f32[1,128], index: 2, kind: input, shape index: {}]
  %s3 = inlined_call_operand.vmem [shape: f32[3,128,128], index: 3, kind: input, shape index: {}]
  %s4 = inlined_call_operand.vmem [shape: f32[1,128], index: 4, kind: input, shape index: {}]
  %s5 = inlined_call_operand.vmem [shape: f32[2,16,128], index: 5, kind: output, shape index: {}]
  %s6 = sld [smem:[#allocation0]]
  $region53: #{tcn_encoder_forward.3} parent=0
    _
  %s8 = ssub.s32 1, %s6
  %s9 = scalar_select 0, %s8, %s6
  loop: start=0, step=1, limit=4
  $region2: #{tcn_encoder_forward.3} parent=0 // loop_pre_header
    _
  $region3: #{tcn_encoder_forward.3} parent=0 // loop_header
    %s11 = sphi 0, %s15
    %p12 = scmp.ge.s32.totalorder %s11, 4
    %s21 = sphi 0, %s23
    %s24 = sphi 0, %s21
    %s25 = sphi 0, %s24
    %s41 = sphi 0, %s25
    %s45 = sphi 0, %s45
    %s47 = sphi 0, %s45
    %s48 = sphi 0, %s47
    %s62 = sphi 0, %s48
    %s66 = sphi 0, %s66
    %s68 = sphi 0, %s66
    %s69 = sphi 0, %s68
    %s83 = sphi 0, %s69
    %s87 = sphi 0, %s87
    %s89 = sphi 0, %s87
    %s90 = sphi 0, %s89
    %s104 = sphi 0, %s90
    %s108 = sphi 0, %s108
    %s110 = sphi 0, %s108
    %s111 = sphi 0, %s110
    %s125 = sphi 0, %s111
    %s131 = sphi 0, %s133
    %s134 = sphi 0, %s131
    %s135 = sphi 0, %s134
    %s151 = sphi 0, %s135
  $region4: #{tcn_encoder_forward.3} parent=0 // loop_header_branch
    %14 = sbr.rel (%p12) target = $region8
  $region5: #{tcn_encoder_forward.3} parent=0 // loop_body
    %s16 = ssub.s32 %s11, 1
    %s17 = ssub.s32 %s11, 2
    %s18 = sadd.s32 %s11, 1
    %s19 = ssub.s32 %s11, %s18
    %p20 = scmp.eq.s32.totalorder %s19, 0
    %s22 = sadd.s32 %s21, 1
    %s23 = scalar_select %p20, %s21, %s22
    %p26 = pneg %p20
    %p27 = scmp.eq.s32.totalorder %s11, 1
    %p28 = por %p26, %p27
    %p29 = scmp.ne.s32.totalorder %s21, %s24
    %p30 = scmp.eq.s32.totalorder %s11, 0
    %p31 = por %p29, %p30
    %p32 = scmp.ne.s32.totalorder %s21, %s24
    %p33 = scmp.eq.s32.totalorder %s16, 1
    %p34 = por %p32, %p33
    %p35 = scmp.ne.s32.totalorder %s24, %s25
    %p36 = scmp.eq.s32.totalorder %s16, 0
    %p37 = por %p35, %p36
    %p38 = scmp.ne.s32.totalorder %s24, %s25
    %p39 = scmp.eq.s32.totalorder %s17, 1
    %p40 = por %p38, %p39
    %p42 = scmp.ne.s32.totalorder %s25, %s41
    %p43 = scmp.eq.s32.totalorder %s17, 0
    %p44 = por %p42, %p43
    %s46 = sadd.s32 %s45, 1
    %p49 = scmp.eq.s32.totalorder %s11, 1
    %p50 = scmp.ne.s32.totalorder %s45, %s47
    %p51 = scmp.eq.s32.totalorder %s11, 0
    %p52 = por %p50, %p51
    %p53 = scmp.ne.s32.totalorder %s45, %s47
    %p54 = scmp.eq.s32.totalorder %s16, 1
    %p55 = por %p53, %p54
    %p56 = scmp.ne.s32.totalorder %s47, %s48
    %p57 = scmp.eq.s32.totalorder %s16, 0
    %p58 = por %p56, %p57
    %p59 = scmp.ne.s32.totalorder %s47, %s48
    %p60 = scmp.eq.s32.totalorder %s17, 1
    %p61 = por %p59, %p60
    %p63 = scmp.ne.s32.totalorder %s48, %s62
    %p64 = scmp.eq.s32.totalorder %s17, 0
    %p65 = por %p63, %p64
    %s67 = sadd.s32 %s66, 1
    %p70 = scmp.eq.s32.totalorder %s11, 1
    %p71 = scmp.ne.s32.totalorder %s66, %s68
    %p72 = scmp.eq.s32.totalorder %s11, 0
    %p73 = por %p71, %p72
    %p74 = scmp.ne.s32.totalorder %s66, %s68
    %p75 = scmp.eq.s32.totalorder %s16, 1
    %p76 = por %p74, %p75
    %p77 = scmp.ne.s32.totalorder %s68, %s69
    %p78 = scmp.eq.s32.totalorder %s16, 0
    %p79 = por %p77, %p78
    %p80 = scmp.ne.s32.totalorder %s68, %s69
    %p81 = scmp.eq.s32.totalorder %s17, 1
    %p82 = por %p80, %p81
    %p84 = scmp.ne.s32.totalorder %s69, %s83
    %p85 = scmp.eq.s32.totalorder %s17, 0
    %p86 = por %p84, %p85
    %s88 = sadd.s32 %s87, 1
    %p91 = scmp.eq.s32.totalorder %s11, 1
    %p92 = scmp.ne.s32.totalorder %s87, %s89
    %p93 = scmp.eq.s32.totalorder %s11, 0
    %p94 = por %p92, %p93
    %p95 = scmp.ne.s32.totalorder %s87, %s89
    %p96 = scmp.eq.s32.totalorder %s16, 1
    %p97 = por %p95, %p96
    %p98 = scmp.ne.s32.totalorder %s89, %s90
    %p99 = scmp.eq.s32.totalorder %s16, 0
    %p100 = por %p98, %p99
    %p101 = scmp.ne.s32.totalorder %s89, %s90
    %p102 = scmp.eq.s32.totalorder %s17, 1
    %p103 = por %p101, %p102
    %p105 = scmp.ne.s32.totalorder %s90, %s104
    %p106 = scmp.eq.s32.totalorder %s17, 0
    %p107 = por %p105, %p106
    %s109 = sadd.s32 %s108, 1
    %p112 = scmp.eq.s32.totalorder %s11, 1
    %p113 = scmp.ne.s32.totalorder %s108, %s110
    %p114 = scmp.eq.s32.totalorder %s11, 0
    %p115 = por %p113, %p114
    %p116 = scmp.ne.s32.totalorder %s108, %s110
    %p117 = scmp.eq.s32.totalorder %s16, 1
    %p118 = por %p116, %p117
    %p119 = scmp.ne.s32.totalorder %s110, %s111
    %p120 = scmp.eq.s32.totalorder %s16, 0
    %p121 = por %p119, %p120
    %p122 = scmp.ne.s32.totalorder %s110, %s111
    %p123 = scmp.eq.s32.totalorder %s17, 1
    %p124 = por %p122, %p123
    %p126 = scmp.ne.s32.totalorder %s111, %s125
    %p127 = scmp.eq.s32.totalorder %s17, 0
    %p128 = por %p126, %p127
    %s129 = ssub.s32 %s11, %s18
    %p130 = scmp.eq.s32.totalorder %s129, 0
    %s132 = sadd.s32 %s131, 1
    %s133 = scalar_select %p130, %s131, %s132
    %p136 = pneg %p130
    %p137 = scmp.eq.s32.totalorder %s11, 1
    %p138 = por %p136, %p137
    %p139 = scmp.ne.s32.totalorder %s131, %s134
    %p140 = scmp.eq.s32.totalorder %s11, 0
    %p141 = por %p139, %p140
    %p142 = scmp.ne.s32.totalorder %s131, %s134
    %p143 = scmp.eq.s32.totalorder %s16, 1
    %p144 = por %p142, %p143
    %p145 = scmp.ne.s32.totalorder %s134, %s135
    %p146 = scmp.eq.s32.totalorder %s16, 0
    %p147 = por %p145, %p146
    %p148 = scmp.ne.s32.totalorder %s134, %s135
    %p149 = scmp.eq.s32.totalorder %s17, 1
    %p150 = por %p148, %p149
    %p152 = scmp.ne.s32.totalorder %s135, %s151
    %p153 = scmp.eq.s32.totalorder %s17, 0
    %p154 = por %p152, %p153
    %p155 = scmp.le.s32.totalorder 1, %s11
    %p156 = scmp.lt.s32.totalorder %s11, 3
    %p157 = pnand %p155, %p156
    %p158 = pneg %p157
    // Predicated region
    $region9: #{tcn_encoder_forward.3} parent=5 // pred_check
      _
    $region10: #{tcn_encoder_forward.3} parent=5 // pred_check_branch
      %160 = sbr.rel (%p157) target = $region12
    $region11: #{tcn_encoder_forward.3} parent=5 // pred_region
      %s161 = ssub.s32 %s11, 1
      // Predicated region
      $region13: #{tcn_encoder_forward.3} parent=11 // pred_check
        %p162 = pneg %p58
      $region14: #{tcn_encoder_forward.3} parent=11 // pred_check_branch
        %164 = sbr.rel (%p162) target = $region16
      $region15: #{tcn_encoder_forward.3} parent=11 // pred_region
        _
      $region16: #{tcn_encoder_forward.3} parent=11 // pred_fallthru
        _
      // Predicated region
      $region17: #{tcn_encoder_forward.3} parent=11 // pred_check
        %p165 = pneg %p79
      $region18: #{tcn_encoder_forward.3} parent=11 // pred_check_branch
        %167 = sbr.rel (%p165) target = $region20
      $region19: #{tcn_encoder_forward.3} parent=11 // pred_region
        _
      $region20: #{tcn_encoder_forward.3} parent=11 // pred_fallthru
        _
      // Predicated region
      $region21: #{tcn_encoder_forward.3} parent=11 // pred_check
        %p168 = pneg %p100
      $region22: #{tcn_encoder_forward.3} parent=11 // pred_check_branch
        %170 = sbr.rel (%p168) target = $region24
      $region23: #{tcn_encoder_forward.3} parent=11 // pred_region
        _
      $region24: #{tcn_encoder_forward.3} parent=11 // pred_fallthru
        _
      // Predicated region
      $region25: #{tcn_encoder_forward.3} parent=11 // pred_check
        %p171 = pneg %p121
      $region26: #{tcn_encoder_forward.3} parent=11 // pred_check_branch
        %173 = sbr.rel (%p171) target = $region28
      $region27: #{tcn_encoder_forward.3} parent=11 // pred_region
        _
      $region28: #{tcn_encoder_forward.3} parent=11 // pred_fallthru
        _
    $region12: #{tcn_encoder_forward.3} parent=5 // pred_fallthru
      _
    %p174 = scmp.lt.s32.totalorder %s11, 2
    // Predicated region
    $region29: #{tcn_encoder_forward.3} parent=5 // pred_check
      %p175 = pneg %p174
    $region30: #{tcn_encoder_forward.3} parent=5 // pred_check_branch
      %177 = sbr.rel (%p175) target = $region32
    $region31: #{tcn_encoder_forward.3} parent=5 // pred_region
      // Predicated region
      $region33: #{tcn_encoder_forward.3} parent=31 // pred_check
        %p178 = pneg %p31
      $region34: #{tcn_encoder_forward.3} parent=31 // pred_check_branch
        %180 = sbr.rel (%p178) target = $region36
      $region35: #{tcn_encoder_forward.3} parent=31 // pred_region
        %p181 = scmp.lt.s32.totalorder %s11, 1
        %s182 = scalar_select %p181, %s11, 1
        %s183 = smul.addr %s182, 2
        %s184 = smul.addr %s183, 8
        %s185 = scalar_lea.vmem %s0, %s184
      $region36: #{tcn_encoder_forward.3} parent=31 // pred_fallthru
        _
    $region32: #{tcn_encoder_forward.3} parent=5 // pred_fallthru
      _
    %p186 = scmp.le.s32.totalorder 1, %s11
    %p187 = scmp.lt.s32.totalorder %s11, 3
    %p188 = pnand %p186, %p187
    %p189 = pneg %p188
    // Predicated region
    $region37: #{tcn_encoder_forward.3} parent=5 // pred_check
      _
    $region38: #{tcn_encoder_forward.3} parent=5 // pred_check_branch
      %191 = sbr.rel (%p188) target = $region40
    $region39: #{tcn_encoder_forward.3} parent=5 // pred_region
      %s192 = ssub.s32 %s11, 1
      %p193 = scmp.lt.s32.totalorder %s16, 1
      %s194 = scalar_select %p193, %s16, 1
      %s195 = smul.addr %s194, 2
      %s196 = smul.addr %s195, 8
      %s197 = scalar_lea.vmem %s0, %s196
      %p198 = pneg %p37
      %p199 = pneg %p34
      %p200 = pneg %p58
      %p201 = pneg %p55
      %p202 = pneg %p79
      %p203 = pneg %p76
      %p204 = pneg %p100
      %p205 = pneg %p97
      %p206 = pneg %p121
      %p207 = pneg %p118
      %p208 = pneg %p147
      %p209 = pneg %p144
      %p210 = scmp.lt.s32.totalorder %s16, 1
      %s211 = scalar_select %p210, %s16, 1
      %s212 = smul.addr %s211, 2
      %s213 = smul.addr %s212, 8
      %s214 = scalar_lea.vmem %s5, %s213
      %p215 = scmp.lt.s32.totalorder %s16, 1
      %s216 = scalar_select %p215, %s16, 1
      %s217 = smul.addr %s216, 2
      %s218 = smul.addr %s217, 8
      %s219 = scalar_lea.vmem %s0, %s218
      %p220 = scmp.lt.s32.totalorder %s16, 1
      %s221 = scalar_select %p220, %s16, 1
      %s222 = smul.addr %s221, 2
      %s223 = smul.addr %s222, 8
      %s224 = scalar_lea.vmem %s5, %s223
      %225 = vst [vmem:[#allocation2] sm:$0xff] 0.0
      %226 = vst [vmem:[#allocation3] sm:$0xff] 0.0
      %v227 = vld [vmem:[%s219] sm:$0xff]
      %v228 = vld [vmem:[%s219 + $0x8] sm:$0xff]
      %229 = vst [vmem:[#allocation2 + $0x8] sm:$0xff] %v227
      %230 = vst [vmem:[#allocation2 + $0x10] sm:$0xff] %v228
      %v231 = vld [vmem:[%s2] sm:$0x1]
      %v233 = vlaneseq
      %v234 = vshrl.u32 %v233, 7
      %v235 = vsub.s32 0, %v234
      %v236 = vrot.slane %v231, %v235
      %v238 = vld [vmem:[#allocation2 + $0x4] sm:$0xff]
      %v239 = vld [vmem:[#allocation2 + $0xc] sm:$0xff]
      %v240 = vld [vmem:[%s1] sm:$0xff]
      %v241 = vld [vmem:[%s1 + $0x8] sm:$0xff]
      %v242 = vld [vmem:[%s1 + $0x10] sm:$0xff]
      %v243 = vld [vmem:[%s1 + $0x18] sm:$0xff]
      %v244 = vld [vmem:[%s1 + $0x20] sm:$0xff]
      %v245 = vld [vmem:[%s1 + $0x28] sm:$0xff]
      %v246 = vld [vmem:[%s1 + $0x30] sm:$0xff]
      %v247 = vld [vmem:[%s1 + $0x38] sm:$0xff]
      %v248 = vld [vmem:[%s1 + $0x40] sm:$0xff]
      %v249 = vld [vmem:[%s1 + $0x48] sm:$0xff]
      %v250 = vld [vmem:[%s1 + $0x50] sm:$0xff]
      %v251 = vld [vmem:[%s1 + $0x58] sm:$0xff]
      %v252 = vld [vmem:[%s1 + $0x60] sm:$0xff]
      %v253 = vld [vmem:[%s1 + $0x68] sm:$0xff]
      %v254 = vld [vmem:[%s1 + $0x70] sm:$0xff]
      %v255 = vld [vmem:[%s1 + $0x78] sm:$0xff]
      %256 = vmatprep.subr.mxu0 0.0
      %257 = vmatpush1.msra.mxu0 %v240
      %258 = vmatprep.subr.mxu0 0.0
      %259 = vmatpush1.msra.mxu0 %v241
      %260 = vmatprep.subr.mxu0 0.0
      %261 = vmatpush1.msra.mxu0 %v242
      %262 = vmatprep.subr.mxu0 0.0
      %263 = vmatpush1.msra.mxu0 %v243
      %264 = vmatprep.subr.mxu0 0.0
      %265 = vmatpush1.msra.mxu0 %v244
      %266 = vmatprep.subr.mxu0 0.0
      %267 = vmatpush1.msra.mxu0 %v245
      %268 = vmatprep.subr.mxu0 0.0
      %269 = vmatpush1.msra.mxu0 %v246
      %270 = vmatprep.subr.mxu0 0.0
      %271 = vmatpush1.msra.mxu0 %v247
      %272 = vmatprep.subr.mxu0 0.0
      %273 = vmatpush1.msra.mxu0 %v248
      %274 = vmatprep.subr.mxu0 0.0
      %275 = vmatpush1.msra.mxu0 %v249
      %276 = vmatprep.subr.mxu0 0.0
      %277 = vmatpush1.msra.mxu0 %v250
      %278 = vmatprep.subr.mxu0 0.0
      %279 = vmatpush1.msra.mxu0 %v251
      %280 = vmatprep.subr.mxu0 0.0
      %281 = vmatpush1.msra.mxu0 %v252
      %282 = vmatprep.subr.mxu0 0.0
      %283 = vmatpush1.msra.mxu0 %v253
      %284 = vmatprep.subr.mxu0 0.0
      %285 = vmatpush1.msra.mxu0 %v254
      %286 = vmatprep.subr.mxu0 0.0
      %287 = vmatpush1.msra.mxu0 %v255
      %288 = vmatprep.subr.mxu0 0.0
      %289 = vmatpush1.msra.mxu0 0.0
      %290 = vmatprep.subr.mxu0 0.0
      %291 = vmatpush1.msra.mxu0 0.0
      %292 = vmatprep.subr.mxu0 0.0
      %293 = vmatpush1.msra.mxu0 0.0
      %294 = vmatprep.subr.mxu0 0.0
      %295 = vmatpush1.msra.mxu0 0.0
      %296 = vmatprep.subr.mxu0 0.0
      %297 = vmatpush1.msra.mxu0 0.0
      %298 = vmatprep.subr.mxu0 0.0
      %299 = vmatpush1.msra.mxu0 0.0
      %300 = vmatprep.subr.mxu0 0.0
      %301 = vmatpush1.msra.mxu0 0.0
      %302 = vmatprep.subr.mxu0 0.0
      %303 = vmatpush1.msra.mxu0 0.0
      %304 = vmatprep.subr.mxu0 0.0
      %305 = vmatpush1.msra.mxu0 0.0
      %306 = vmatprep.subr.mxu0 0.0
      %307 = vmatpush1.msra.mxu0 0.0
      %308 = vmatprep.subr.mxu0 0.0
      %309 = vmatpush1.msra.mxu0 0.0
      %310 = vmatprep.subr.mxu0 0.0
      %311 = vmatpush1.msra.mxu0 0.0
      %312 = vmatprep.subr.mxu0 0.0
      %313 = vmatpush1.msra.mxu0 0.0
      %314 = vmatprep.subr.mxu0 0.0
      %315 = vmatpush1.msra.mxu0 0.0
      %316 = vmatprep.subr.mxu0 0.0
      %317 = vmatpush1.msra.mxu0 0.0
      %318 = vmatprep.subr.mxu0 0.0
      %319 = vmatpush1.msra.mxu0 0.0
      %320 = vmatprep.mubr.f32.mxu0 0.0
      %321 = vmatmul.mubr.f32.gmra.mrb[0].mxu0 %v238
      %v322 = vpop.f32.mrb[0].mxu0
      %v323 = vadd.f32 0.0, %v322
      %v324 = vpop.f32.mrb[0].mxu0
      %325 = vmatprep.mubr.f32.mxu0 0.0
      %326 = vmatmul.mubr.f32.gmra.mrb[0].mxu0 %v239
      %v327 = vpop.f32.mrb[0].mxu0
      %v328 = vadd.f32 0.0, %v327
      %v329 = vpop.f32.mrb[0].mxu0
      %330 = vdwg.mxu0
      %v331 = vadd.f32 %v236, %v323
      %v332 = vadd.f32 %v236, %v328
      %v333 = vld [vmem:[#allocation2 + $0x6] sm:$0xff]
      %v334 = vld [vmem:[#allocation2 + $0xe] sm:$0xff]
      %s335 = scalar_lea.vmem %s1, 128
      %v336 = vld [vmem:[%s335] sm:$0xff]
      %v337 = vld [vmem:[%s335 + $0x8] sm:$0xff]
      %v338 = vld [vmem:[%s335 + $0x10] sm:$0xff]
      %v339 = vld [vmem:[%s335 + $0x18] sm:$0xff]
      %v340 = vld [vmem:[%s335 + $0x20] sm:$0xff]
      %v341 = vld [vmem:[%s335 + $0x28] sm:$0xff]
      %v342 = vld [vmem:[%s335 + $0x30] sm:$0xff]
      %v343 = vld [vmem:[%s335 + $0x38] sm:$0xff]
      %v344 = vld [vmem:[%s335 + $0x40] sm:$0xff]
      %v345 = vld [vmem:[%s335 + $0x48] sm:$0xff]
      %v346 = vld [vmem:[%s335 + $0x50] sm:$0xff]
      %v347 = vld [vmem:[%s335 + $0x58] sm:$0xff]
      %v348 = vld [vmem:[%s335 + $0x60] sm:$0xff]
      %v349 = vld [vmem:[%s335 + $0x68] sm:$0xff]
      %v350 = vld [vmem:[%s335 + $0x70] sm:$0xff]
      %v351 = vld [vmem:[%s335 + $0x78] sm:$0xff]
      %352 = vmatprep.subr.mxu0 0.0
      %353 = vmatpush1.msra.mxu0 %v336
      %354 = vmatprep.subr.mxu0 0.0
      %355 = vmatpush1.msra.mxu0 %v337
      %356 = vmatprep.subr.mxu0 0.0
      %357 = vmatpush1.msra.mxu0 %v338
      %358 = vmatprep.subr.mxu0 0.0
      %359 = vmatpush1.msra.mxu0 %v339
      %360 = vmatprep.subr.mxu0 0.0
      %361 = vmatpush1.msra.mxu0 %v340
      %362 = vmatprep.subr.mxu0 0.0
      %363 = vmatpush1.msra.mxu0 %v341
      %364 = vmatprep.subr.mxu0 0.0
      %365 = vmatpush1.msra.mxu0 %v342
      %366 = vmatprep.subr.mxu0 0.0
      %367 = vmatpush1.msra.mxu0 %v343
      %368 = vmatprep.subr.mxu0 0.0
      %369 = vmatpush1.msra.mxu0 %v344
      %370 = vmatprep.subr.mxu0 0.0
      %371 = vmatpush1.msra.mxu0 %v345
      %372 = vmatprep.subr.mxu0 0.0
      %373 = vmatpush1.msra.mxu0 %v346
      %374 = vmatprep.subr.mxu0 0.0
      %375 = vmatpush1.msra.mxu0 %v347
      %376 = vmatprep.subr.mxu0 0.0
      %377 = vmatpush1.msra.mxu0 %v348
      %378 = vmatprep.subr.mxu0 0.0
      %379 = vmatpush1.msra.mxu0 %v349
      %380 = vmatprep.subr.mxu0 0.0
      %381 = vmatpush1.msra.mxu0 %v350
      %382 = vmatprep.subr.mxu0 0.0
      %383 = vmatpush1.msra.mxu0 %v351
      %384 = vmatprep.subr.mxu0 0.0
      %385 = vmatpush1.msra.mxu0 0.0
      %386 = vmatprep.subr.mxu0 0.0
      %387 = vmatpush1.msra.mxu0 0.0
      %388 = vmatprep.subr.mxu0 0.0
      %389 = vmatpush1.msra.mxu0 0.0
      %390 = vmatprep.subr.mxu0 0.0
      %391 = vmatpush1.msra.mxu0 0.0
      %392 = vmatprep.subr.mxu0 0.0
      %393 = vmatpush1.msra.mxu0 0.0
      %394 = vmatprep.subr.mxu0 0.0
      %395 = vmatpush1.msra.mxu0 0.0
      %396 = vmatprep.subr.mxu0 0.0
      %397 = vmatpush1.msra.mxu0 0.0
      %398 = vmatprep.subr.mxu0 0.0
      %399 = vmatpush1.msra.mxu0 0.0
      %400 = vmatprep.subr.mxu0 0.0
      %401 = vmatpush1.msra.mxu0 0.0
      %402 = vmatprep.subr.mxu0 0.0
      %403 = vmatpush1.msra.mxu0 0.0
      %404 = vmatprep.subr.mxu0 0.0
      %405 = vmatpush1.msra.mxu0 0.0
      %406 = vmatprep.subr.mxu0 0.0
      %407 = vmatpush1.msra.mxu0 0.0
      %408 = vmatprep.subr.mxu0 0.0
      %409 = vmatpush1.msra.mxu0 0.0
      %410 = vmatprep.subr.mxu0 0.0
      %411 = vmatpush1.msra.mxu0 0.0
      %412 = vmatprep.subr.mxu0 0.0
      %413 = vmatpush1.msra.mxu0 0.0
      %414 = vmatprep.subr.mxu0 0.0
      %415 = vmatpush1.msra.mxu0 0.0
      %416 = vmatprep.mubr.f32.mxu0 0.0
      %417 = vmatmul.mubr.f32.gmra.mrb[0].mxu0 %v333
      %v418 = vpop.f32.mrb[0].mxu0
      %v419 = vadd.f32 0.0, %v418
      %v420 = vpop.f32.mrb[0].mxu0
      %421 = vmatprep.mubr.f32.mxu0 0.0
      %422 = vmatmul.mubr.f32.gmra.mrb[0].mxu0 %v334
      %v423 = vpop.f32.mrb[0].mxu0
      %v424 = vadd.f32 0.0, %v423
      %v425 = vpop.f32.mrb[0].mxu0
      %426 = vdwg.mxu0
      %v427 = vadd.f32 %v331, %v419
      %v428 = vadd.f32 %v332, %v424
      %v429 = vld [vmem:[#allocation2 + $0x8] sm:$0xff]
      %v430 = vld [vmem:[#allocation2 + $0x10] sm:$0xff]
      %s431 = scalar_lea.vmem %s1, 256
      %v432 = vld [vmem:[%s431] sm:$0xff]
      %v433 = vld [vmem:[%s431 + $0x8] sm:$0xff]
      %v434 = vld [vmem:[%s431 + $0x10] sm:$0xff]
      %v435 = vld [vmem:[%s431 + $0x18] sm:$0xff]
      %v436 = vld [vmem:[%s431 + $0x20] sm:$0xff]
      %v437 = vld [vmem:[%s431 + $0x28] sm:$0xff]
      %v438 = vld [vmem:[%s431 + $0x30] sm:$0xff]
      %v439 = vld [vmem:[%s431 + $0x38] sm:$0xff]
      %v440 = vld [vmem:[%s431 + $0x40] sm:$0xff]
      %v441 = vld [vmem:[%s431 + $0x48] sm:$0xff]
      %v442 = vld [vmem:[%s431 + $0x50] sm:$0xff]
      %v443 = vld [vmem:[%s431 + $0x58] sm:$0xff]
      %v444 = vld [vmem:[%s431 + $0x60] sm:$0xff]
      %v445 = vld [vmem:[%s431 + $0x68] sm:$0xff]
      %v446 = vld [vmem:[%s431 + $0x70] sm:$0xff]
      %v447 = vld [vmem:[%s431 + $0x78] sm:$0xff]
      %448 = vmatprep.subr.mxu0 0.0
      %449 = vmatpush1.msra.mxu0 %v432
      %450 = vmatprep.subr.mxu0 0.0
      %451 = vmatpush1.msra.mxu0 %v433
      %452 = vmatprep.subr.mxu0 0.0
      %453 = vmatpush1.msra.mxu0 %v434
      %454 = vmatprep.subr.mxu0 0.0
      %455 = vmatpush1.msra.mxu0 %v435
      %456 = vmatprep.subr.mxu0 0.0
      %457 = vmatpush1.msra.mxu0 %v436
      %458 = vmatprep.subr.mxu0 0.0
      %459 = vmatpush1.msra.mxu0 %v437
      %460 = vmatprep.subr.mxu0 0.0
      %461 = vmatpush1.msra.mxu0 %v438
      %462 = vmatprep.subr.mxu0 0.0
      %463 = vmatpush1.msra.mxu0 %v439
      %464 = vmatprep.subr.mxu0 0.0
      %465 = vmatpush1.msra.mxu0 %v440
      %466 = vmatprep.subr.mxu0 0.0
      %467 = vmatpush1.msra.mxu0 %v441
      %468 = vmatprep.subr.mxu0 0.0
      %469 = vmatpush1.msra.mxu0 %v442
      %470 = vmatprep.subr.mxu0 0.0
      %471 = vmatpush1.msra.mxu0 %v443
      %472 = vmatprep.subr.mxu0 0.0
      %473 = vmatpush1.msra.mxu0 %v444
      %474 = vmatprep.subr.mxu0 0.0
      %475 = vmatpush1.msra.mxu0 %v445
      %476 = vmatprep.subr.mxu0 0.0
      %477 = vmatpush1.msra.mxu0 %v446
      %478 = vmatprep.subr.mxu0 0.0
      %479 = vmatpush1.msra.mxu0 %v447
      %480 = vmatprep.subr.mxu0 0.0
      %481 = vmatpush1.msra.mxu0 0.0
      %482 = vmatprep.subr.mxu0 0.0
      %483 = vmatpush1.msra.mxu0 0.0
      %484 = vmatprep.subr.mxu0 0.0
      %485 = vmatpush1.msra.mxu0 0.0
      %486 = vmatprep.subr.mxu0 0.0
      %487 = vmatpush1.msra.mxu0 0.0
      %488 = vmatprep.subr.mxu0 0.0
      %489 = vmatpush1.msra.mxu0 0.0
      %490 = vmatprep.subr.mxu0 0.0
      %491 = vmatpush1.msra.mxu0 0.0
      %492 = vmatprep.subr.mxu0 0.0
      %493 = vmatpush1.msra.mxu0 0.0
      %494 = vmatprep.subr.mxu0 0.0
      %495 = vmatpush1.msra.mxu0 0.0
      %496 = vmatprep.subr.mxu0 0.0
      %497 = vmatpush1.msra.mxu0 0.0
      %498 = vmatprep.subr.mxu0 0.0
      %499 = vmatpush1.msra.mxu0 0.0
      %500 = vmatprep.subr.mxu0 0.0
      %501 = vmatpush1.msra.mxu0 0.0
      %502 = vmatprep.subr.mxu0 0.0
      %503 = vmatpush1.msra.mxu0 0.0
      %504 = vmatprep.subr.mxu0 0.0
      %505 = vmatpush1.msra.mxu0 0.0
      %506 = vmatprep.subr.mxu0 0.0
      %507 = vmatpush1.msra.mxu0 0.0
      %508 = vmatprep.subr.mxu0 0.0
      %509 = vmatpush1.msra.mxu0 0.0
      %510 = vmatprep.subr.mxu0 0.0
      %511 = vmatpush1.msra.mxu0 0.0
      %512 = vmatprep.mubr.f32.mxu0 0.0
      %513 = vmatmul.mubr.f32.gmra.mrb[0].mxu0 %v429
      %v514 = vpop.f32.mrb[0].mxu0
      %v515 = vadd.f32 0.0, %v514
      %v516 = vpop.f32.mrb[0].mxu0
      %517 = vmatprep.mubr.f32.mxu0 0.0
      %518 = vmatmul.mubr.f32.gmra.mrb[0].mxu0 %v430
      %v519 = vpop.f32.mrb[0].mxu0
      %v520 = vadd.f32 0.0, %v519
      %v521 = vpop.f32.mrb[0].mxu0
      %522 = vdwg.mxu0
      %v523 = vadd.f32 %v427, %v515
      %v524 = vadd.f32 %v428, %v520
      %v525 = vmax.f32 %v523, 0.0
      %v526 = vmax.f32 %v524, 0.0
      %527 = vst [vmem:[#allocation3 + $0x8] sm:$0xff] %v525
      %528 = vst [vmem:[#allocation3 + $0x10] sm:$0xff] %v526
      %v529 = vld [vmem:[%s219] sm:$0xff]
      %v530 = vld [vmem:[%s219 + $0x8] sm:$0xff]
      %v531 = vld [vmem:[%s4] sm:$0x1]
      %v533 = vlaneseq
      %v534 = vshrl.u32 %v533, 7
      %v535 = vsub.s32 0, %v534
      %v536 = vrot.slane %v531, %v535
      %v538 = vld [vmem:[#allocation3 + $0x4] sm:$0xff]
      %v539 = vld [vmem:[#allocation3 + $0xc] sm:$0xff]
      %v540 = vld [vmem:[%s3] sm:$0xff]
      %v541 = vld [vmem:[%s3 + $0x8] sm:$0xff]
      %v542 = vld [vmem:[%s3 + $0x10] sm:$0xff]
      %v543 = vld [vmem:[%s3 + $0x18] sm:$0xff]
      %v544 = vld [vmem:[%s3 + $0x20] sm:$0xff]
      %v545 = vld [vmem:[%s3 + $0x28] sm:$0xff]
      %v546 = vld [vmem:[%s3 + $0x30] sm:$0xff]
      %v547 = vld [vmem:[%s3 + $0x38] sm:$0xff]
      %v548 = vld [vmem:[%s3 + $0x40] sm:$0xff]
      %v549 = vld [vmem:[%s3 + $0x48] sm:$0xff]
      %v550 = vld [vmem:[%s3 + $0x50] sm:$0xff]
      %v551 = vld [vmem:[%s3 + $0x58] sm:$0xff]
      %v552 = vld [vmem:[%s3 + $0x60] sm:$0xff]
      %v553 = vld [vmem:[%s3 + $0x68] sm:$0xff]
      %v554 = vld [vmem:[%s3 + $0x70] sm:$0xff]
      %v555 = vld [vmem:[%s3 + $0x78] sm:$0xff]
      %556 = vmatprep.subr.mxu0 0.0
      %557 = vmatpush1.msra.mxu0 %v540
      %558 = vmatprep.subr.mxu0 0.0
      %559 = vmatpush1.msra.mxu0 %v541
      %560 = vmatprep.subr.mxu0 0.0
      %561 = vmatpush1.msra.mxu0 %v542
      %562 = vmatprep.subr.mxu0 0.0
      %563 = vmatpush1.msra.mxu0 %v543
      %564 = vmatprep.subr.mxu0 0.0
      %565 = vmatpush1.msra.mxu0 %v544
      %566 = vmatprep.subr.mxu0 0.0
      %567 = vmatpush1.msra.mxu0 %v545
      %568 = vmatprep.subr.mxu0 0.0
      %569 = vmatpush1.msra.mxu0 %v546
      %570 = vmatprep.subr.mxu0 0.0
      %571 = vmatpush1.msra.mxu0 %v547
      %572 = vmatprep.subr.mxu0 0.0
      %573 = vmatpush1.msra.mxu0 %v548
      %574 = vmatprep.subr.mxu0 0.0
      %575 = vmatpush1.msra.mxu0 %v549
      %576 = vmatprep.subr.mxu0 0.0
      %577 = vmatpush1.msra.mxu0 %v550
      %578 = vmatprep.subr.mxu0 0.0
      %579 = vmatpush1.msra.mxu0 %v551
      %580 = vmatprep.subr.mxu0 0.0
      %581 = vmatpush1.msra.mxu0 %v552
      %582 = vmatprep.subr.mxu0 0.0
      %583 = vmatpush1.msra.mxu0 %v553
      %584 = vmatprep.subr.mxu0 0.0
      %585 = vmatpush1.msra.mxu0 %v554
      %586 = vmatprep.subr.mxu0 0.0
      %587 = vmatpush1.msra.mxu0 %v555
      %588 = vmatprep.subr.mxu0 0.0
      %589 = vmatpush1.msra.mxu0 0.0
      %590 = vmatprep.subr.mxu0 0.0
      %591 = vmatpush1.msra.mxu0 0.0
      %592 = vmatprep.subr.mxu0 0.0
      %593 = vmatpush1.msra.mxu0 0.0
      %594 = vmatprep.subr.mxu0 0.0
      %595 = vmatpush1.msra.mxu0 0.0
      %596 = vmatprep.subr.mxu0 0.0
      %597 = vmatpush1.msra.mxu0 0.0
      %598 = vmatprep.subr.mxu0 0.0
      %599 = vmatpush1.msra.mxu0 0.0
      %600 = vmatprep.subr.mxu0 0.0
      %601 = vmatpush1.msra.mxu0 0.0
      %602 = vmatprep.subr.mxu0 0.0
      %603 = vmatpush1.msra.mxu0 0.0
      %604 = vmatprep.subr.mxu0 0.0
      %605 = vmatpush1.msra.mxu0 0.0
      %606 = vmatprep.subr.mxu0 0.0
      %607 = vmatpush1.msra.mxu0 0.0
      %608 = vmatprep.subr.mxu0 0.0
      %609 = vmatpush1.msra.mxu0 0.0
      %610 = vmatprep.subr.mxu0 0.0
      %611 = vmatpush1.msra.mxu0 0.0
      %612 = vmatprep.subr.mxu0 0.0
      %613 = vmatpush1.msra.mxu0 0.0
      %614 = vmatprep.subr.mxu0 0.0
      %615 = vmatpush1.msra.mxu0 0.0
      %616 = vmatprep.subr.mxu0 0.0
      %617 = vmatpush1.msra.mxu0 0.0
      %618 = vmatprep.subr.mxu0 0.0
      %619 = vmatpush1.msra.mxu0 0.0
      %620 = vmatprep.mubr.f32.mxu0 0.0
      %621 = vmatmul.mubr.f32.gmra.mrb[0].mxu0 %v538
      %v622 = vpop.f32.mrb[0].mxu0
      %v623 = vadd.f32 0.0, %v622
      %v624 = vpop.f32.mrb[0].mxu0
      %625 = vmatprep.mubr.f32.mxu0 0.0
      %626 = vmatmul.mubr.f32.gmra.mrb[0].mxu0 %v539
      %v627 = vpop.f32.mrb[0].mxu0
      %v628 = vadd.f32 0.0, %v627
      %v629 = vpop.f32.mrb[0].mxu0
      %630 = vdwg.mxu0
      %v631 = vadd.f32 %v536, %v623
      %v632 = vadd.f32 %v536, %v628
      %v633 = vld [vmem:[#allocation3 + $0x6] sm:$0xff]
      %v634 = vld [vmem:[#allocation3 + $0xe] sm:$0xff]
      %s635 = scalar_lea.vmem %s3, 128
      %v636 = vld [vmem:[%s635] sm:$0xff]
      %v637 = vld [vmem:[%s635 + $0x8] sm:$0xff]
      %v638 = vld [vmem:[%s635 + $0x10] sm:$0xff]
      %v639 = vld [vmem:[%s635 + $0x18] sm:$0xff]
      %v640 = vld [vmem:[%s635 + $0x20] sm:$0xff]
      %v641 = vld [vmem:[%s635 + $0x28] sm:$0xff]
      %v642 = vld [vmem:[%s635 + $0x30] sm:$0xff]
      %v643 = vld [vmem:[%s635 + $0x38] sm:$0xff]
      %v644 = vld [vmem:[%s635 + $0x40] sm:$0xff]
      %v645 = vld [vmem:[%s635 + $0x48] sm:$0xff]
      %v646 = vld [vmem:[%s635 + $0x50] sm:$0xff]
      %v647 = vld [vmem:[%s635 + $0x58] sm:$0xff]
      %v648 = vld [vmem:[%s635 + $0x60] sm:$0xff]
      %v649 = vld [vmem:[%s635 + $0x68] sm:$0xff]
      %v650 = vld [vmem:[%s635 + $0x70] sm:$0xff]
      %v651 = vld [vmem:[%s635 + $0x78] sm:$0xff]
      %652 = vmatprep.subr.mxu0 0.0
      %653 = vmatpush1.msra.mxu0 %v636
      %654 = vmatprep.subr.mxu0 0.0
      %655 = vmatpush1.msra.mxu0 %v637
      %656 = vmatprep.subr.mxu0 0.0
      %657 = vmatpush1.msra.mxu0 %v638
      %658 = vmatprep.subr.mxu0 0.0
      %659 = vmatpush1.msra.mxu0 %v639
      %660 = vmatprep.subr.mxu0 0.0
      %661 = vmatpush1.msra.mxu0 %v640
      %662 = vmatprep.subr.mxu0 0.0
      %663 = vmatpush1.msra.mxu0 %v641
      %664 = vmatprep.subr.mxu0 0.0
      %665 = vmatpush1.msra.mxu0 %v642
      %666 = vmatprep.subr.mxu0 0.0
      %667 = vmatpush1.msra.mxu0 %v643
      %668 = vmatprep.subr.mxu0 0.0
      %669 = vmatpush1.msra.mxu0 %v644
      %670 = vmatprep.subr.mxu0 0.0
      %671 = vmatpush1.msra.mxu0 %v645
      %672 = vmatprep.subr.mxu0 0.0
      %673 = vmatpush1.msra.mxu0 %v646
      %674 = vmatprep.subr.mxu0 0.0
      %675 = vmatpush1.msra.mxu0 %v647
      %676 = vmatprep.subr.mxu0 0.0
      %677 = vmatpush1.msra.mxu0 %v648
      %678 = vmatprep.subr.mxu0 0.0
      %679 = vmatpush1.msra.mxu0 %v649
      %680 = vmatprep.subr.mxu0 0.0
      %681 = vmatpush1.msra.mxu0 %v650
      %682 = vmatprep.subr.mxu0 0.0
      %683 = vmatpush1.msra.mxu0 %v651
      %684 = vmatprep.subr.mxu0 0.0
      %685 = vmatpush1.msra.mxu0 0.0
      %686 = vmatprep.subr.mxu0 0.0
      %687 = vmatpush1.msra.mxu0 0.0
      %688 = vmatprep.subr.mxu0 0.0
      %689 = vmatpush1.msra.mxu0 0.0
      %690 = vmatprep.subr.mxu0 0.0
      %691 = vmatpush1.msra.mxu0 0.0
      %692 = vmatprep.subr.mxu0 0.0
      %693 = vmatpush1.msra.mxu0 0.0
      %694 = vmatprep.subr.mxu0 0.0
      %695 = vmatpush1.msra.mxu0 0.0
      %696 = vmatprep.subr.mxu0 0.0
      %697 = vmatpush1.msra.mxu0 0.0
      %698 = vmatprep.subr.mxu0 0.0
      %699 = vmatpush1.msra.mxu0 0.0
      %700 = vmatprep.subr.mxu0 0.0
      %701 = vmatpush1.msra.mxu0 0.0
      %702 = vmatprep.subr.mxu0 0.0
      %703 = vmatpush1.msra.mxu0 0.0
      %704 = vmatprep.subr.mxu0 0.0
      %705 = vmatpush1.msra.mxu0 0.0
      %706 = vmatprep.subr.mxu0 0.0
      %707 = vmatpush1.msra.mxu0 0.0
      %708 = vmatprep.subr.mxu0 0.0
      %709 = vmatpush1.msra.mxu0 0.0
      %710 = vmatprep.subr.mxu0 0.0
      %711 = vmatpush1.msra.mxu0 0.0
      %712 = vmatprep.subr.mxu0 0.0
      %713 = vmatpush1.msra.mxu0 0.0
      %714 = vmatprep.subr.mxu0 0.0
      %715 = vmatpush1.msra.mxu0 0.0
      %716 = vmatprep.mubr.f32.mxu0 0.0
      %717 = vmatmul.mubr.f32.gmra.mrb[0].mxu0 %v633
      %v718 = vpop.f32.mrb[0].mxu0
      %v719 = vadd.f32 0.0, %v718
      %v720 = vpop.f32.mrb[0].mxu0
      %721 = vmatprep.mubr.f32.mxu0 0.0
      %722 = vmatmul.mubr.f32.gmra.mrb[0].mxu0 %v634
      %v723 = vpop.f32.mrb[0].mxu0
      %v724 = vadd.f32 0.0, %v723
      %v725 = vpop.f32.mrb[0].mxu0
      %726 = vdwg.mxu0
      %v727 = vadd.f32 %v631, %v719
      %v728 = vadd.f32 %v632, %v724
      %v729 = vld [vmem:[#allocation3 + $0x8] sm:$0xff]
      %v730 = vld [vmem:[#allocation3 + $0x10] sm:$0xff]
      %s731 = scalar_lea.vmem %s3, 256
      %v732 = vld [vmem:[%s731] sm:$0xff]
      %v733 = vld [vmem:[%s731 + $0x8] sm:$0xff]
      %v734 = vld [vmem:[%s731 + $0x10] sm:$0xff]
      %v735 = vld [vmem:[%s731 + $0x18] sm:$0xff]
      %v736 = vld [vmem:[%s731 + $0x20] sm:$0xff]
      %v737 = vld [vmem:[%s731 + $0x28] sm:$0xff]
      %v738 = vld [vmem:[%s731 + $0x30] sm:$0xff]
      %v739 = vld [vmem:[%s731 + $0x38] sm:$0xff]
      %v740 = vld [vmem:[%s731 + $0x40] sm:$0xff]
      %v741 = vld [vmem:[%s731 + $0x48] sm:$0xff]
      %v742 = vld [vmem:[%s731 + $0x50] sm:$0xff]
      %v743 = vld [vmem:[%s731 + $0x58] sm:$0xff]
      %v744 = vld [vmem:[%s731 + $0x60] sm:$0xff]
      %v745 = vld [vmem:[%s731 + $0x68] sm:$0xff]
      %v746 = vld [vmem:[%s731 + $0x70] sm:$0xff]
      %v747 = vld [vmem:[%s731 + $0x78] sm:$0xff]
      %748 = vmatprep.subr.mxu0 0.0
      %749 = vmatpush1.msra.mxu0 %v732
      %750 = vmatprep.subr.mxu0 0.0
      %751 = vmatpush1.msra.mxu0 %v733
      %752 = vmatprep.subr.mxu0 0.0
      %753 = vmatpush1.msra.mxu0 %v734
      %754 = vmatprep.subr.mxu0 0.0
      %755 = vmatpush1.msra.mxu0 %v735
      %756 = vmatprep.subr.mxu0 0.0
      %757 = vmatpush1.msra.mxu0 %v736
      %758 = vmatprep.subr.mxu0 0.0
      %759 = vmatpush1.msra.mxu0 %v737
      %760 = vmatprep.subr.mxu0 0.0
      %761 = vmatpush1.msra.mxu0 %v738
      %762 = vmatprep.subr.mxu0 0.0
      %763 = vmatpush1.msra.mxu0 %v739
      %764 = vmatprep.subr.mxu0 0.0
      %765 = vmatpush1.msra.mxu0 %v740
      %766 = vmatprep.subr.mxu0 0.0
      %767 = vmatpush1.msra.mxu0 %v741
      %768 = vmatprep.subr.mxu0 0.0
      %769 = vmatpush1.msra.mxu0 %v742
      %770 = vmatprep.subr.mxu0 0.0
      %771 = vmatpush1.msra.mxu0 %v743
      %772 = vmatprep.subr.mxu0 0.0
      %773 = vmatpush1.msra.mxu0 %v744
      %774 = vmatprep.subr.mxu0 0.0
      %775 = vmatpush1.msra.mxu0 %v745
      %776 = vmatprep.subr.mxu0 0.0
      %777 = vmatpush1.msra.mxu0 %v746
      %778 = vmatprep.subr.mxu0 0.0
      %779 = vmatpush1.msra.mxu0 %v747
      %780 = vmatprep.subr.mxu0 0.0
      %781 = vmatpush1.msra.mxu0 0.0
      %782 = vmatprep.subr.mxu0 0.0
      %783 = vmatpush1.msra.mxu0 0.0
      %784 = vmatprep.subr.mxu0 0.0
      %785 = vmatpush1.msra.mxu0 0.0
      %786 = vmatprep.subr.mxu0 0.0
      %787 = vmatpush1.msra.mxu0 0.0
      %788 = vmatprep.subr.mxu0 0.0
      %789 = vmatpush1.msra.mxu0 0.0
      %790 = vmatprep.subr.mxu0 0.0
      %791 = vmatpush1.msra.mxu0 0.0
      %792 = vmatprep.subr.mxu0 0.0
      %793 = vmatpush1.msra.mxu0 0.0
      %794 = vmatprep.subr.mxu0 0.0
      %795 = vmatpush1.msra.mxu0 0.0
      %796 = vmatprep.subr.mxu0 0.0
      %797 = vmatpush1.msra.mxu0 0.0
      %798 = vmatprep.subr.mxu0 0.0
      %799 = vmatpush1.msra.mxu0 0.0
      %800 = vmatprep.subr.mxu0 0.0
      %801 = vmatpush1.msra.mxu0 0.0
      %802 = vmatprep.subr.mxu0 0.0
      %803 = vmatpush1.msra.mxu0 0.0
      %804 = vmatprep.subr.mxu0 0.0
      %805 = vmatpush1.msra.mxu0 0.0
      %806 = vmatprep.subr.mxu0 0.0
      %807 = vmatpush1.msra.mxu0 0.0
      %808 = vmatprep.subr.mxu0 0.0
      %809 = vmatpush1.msra.mxu0 0.0
      %810 = vmatprep.subr.mxu0 0.0
      %811 = vmatpush1.msra.mxu0 0.0
      %812 = vmatprep.mubr.f32.mxu0 0.0
      %813 = vmatmul.mubr.f32.gmra.mrb[0].mxu0 %v729
      %v814 = vpop.f32.mrb[0].mxu0
      %v815 = vadd.f32 0.0, %v814
      %v816 = vpop.f32.mrb[0].mxu0
      %817 = vmatprep.mubr.f32.mxu0 0.0
      %818 = vmatmul.mubr.f32.gmra.mrb[0].mxu0 %v730
      %v819 = vpop.f32.mrb[0].mxu0
      %v820 = vadd.f32 0.0, %v819
      %v821 = vpop.f32.mrb[0].mxu0
      %822 = vdwg.mxu0
      %v823 = vadd.f32 %v727, %v815
      %v824 = vadd.f32 %v728, %v820
      %v825 = vmax.f32 %v823, 0.0
      %v826 = vmax.f32 %v824, 0.0
      %v827 = vadd.f32 %v825, %v529
      %v828 = vadd.f32 %v826, %v530
      %v829 = vmax.f32 %v827, 0.0
      %v830 = vmax.f32 %v828, 0.0
      %831 = vst [vmem:[%s224] sm:$0xff] %v829
      %832 = vst [vmem:[%s224 + $0x8] sm:$0xff] %v830
      %p833 = scmp.lt.s32.totalorder %s16, 1
      %s834 = scalar_select %p833, %s16, 1
      %s835 = smul.addr %s834, 2
      %s836 = smul.addr %s835, 8
      %s837 = scalar_lea.vmem %s5, %s836
      // Predicated region
      $region41: #{tcn_encoder_forward.3} parent=39 // pred_check
        %p838 = pneg %p144
      $region42: #{tcn_encoder_forward.3} parent=39 // pred_check_branch
        %840 = sbr.rel (%p838) target = $region44
      $region43: #{tcn_encoder_forward.3} parent=39 // pred_region
        _
      $region44: #{tcn_encoder_forward.3} parent=39 // pred_fallthru
        _
    $region40: #{tcn_encoder_forward.3} parent=5 // pred_fallthru
      _
    %p841 = scmp.le.s32.totalorder 2, %s11
    // Predicated region
    $region45: #{tcn_encoder_forward.3} parent=5 // pred_check
      %p842 = pneg %p841
    $region46: #{tcn_encoder_forward.3} parent=5 // pred_check_branch
      %844 = sbr.rel (%p842) target = $region48
    $region47: #{tcn_encoder_forward.3} parent=5 // pred_region
      %s845 = ssub.s32 %s11, 2
      // Predicated region
      $region49: #{tcn_encoder_forward.3} parent=47 // pred_check
        %p846 = pneg %p150
      $region50: #{tcn_encoder_forward.3} parent=47 // pred_check_branch
        %848 = sbr.rel (%p846) target = $region52
      $region51: #{tcn_encoder_forward.3} parent=47 // pred_region
        %p849 = scmp.lt.s32.totalorder %s17, 1
        %s850 = scalar_select %p849, %s17, 1
        %s851 = smul.addr %s850, 2
        %s852 = smul.addr %s851, 8
        %s853 = scalar_lea.vmem %s5, %s852
      $region52: #{tcn_encoder_forward.3} parent=47 // pred_fallthru
        _
    $region48: #{tcn_encoder_forward.3} parent=5 // pred_fallthru
      _
  $region6: #{tcn_encoder_forward.3} parent=0 // loop_footer
    %s15 = sadd.s32 1, %s11
  $region7: #{tcn_encoder_forward.3} parent=0 // loop_footer_branch
    %10 = sbr.rel target = $region3
  $region8: #{tcn_encoder_forward.3} parent=0 // loop_exit
    _

// kernel: tcn_encoder_forward.2
$region0: #{tcn_encoder_forward.2}
  #allocation0 [shape = 'u32[]', space=smem, size = 0x4, offset = 0x4, fixed_abs, tag = 'smem constant byte address 0x4 - core index']
  #allocation1 [shape = 'u32[144,128]{1,0:T(1,128)}', space=vmem, size = 0x12000, scoped, tag = 'internal scratch']
  #allocation2 [shape = 'f32[24,128]{1,0:T(8,128)}', space=vmem, size = 0x3000, scoped, tag = 'scratch operand']
  #allocation3 [shape = 'f32[24,128]{1,0:T(8,128)}', space=vmem, size = 0x3000, scoped, tag = 'scratch operand']
  %s0 = inlined_call_operand.vmem [shape: f32[2,16,128], index: 0, kind: input, shape index: {}]
  %s1 = inlined_call_operand.hbm [shape: f32[3,128,128], index: 1, kind: input, shape index: {}]
  %s2 = inlined_call_operand.vmem [shape: f32[1,128], index: 2, kind: input, shape index: {}]
  %s3 = inlined_call_operand.hbm [shape: f32[3,128,128], index: 3, kind: input, shape index: {}]
  %s4 = inlined_call_operand.vmem [shape: f32[1,128], index: 4, kind: input, shape index: {}]
  %s5 = inlined_call_operand.hbm [shape: f32[128,128], index: 5, kind: input, shape index: {}]
  %s6 = inlined_call_operand.vmem [shape: f32[1,128], index: 6, kind: input, shape index: {}]
  %s7 = inlined_call_operand.vmem [shape: f32[2,16,128], index: 7, kind: output, shape index: {}]
  %s8 = sld [smem:[#allocation0]]
  $region73: #{tcn_encoder_forward.2} parent=0
    _
  %s10 = ssub.s32 1, %s8
  %s11 = scalar_select 0, %s10, %s8
  $region1: #{tcn_encoder_forward.2} parent=0
    #allocation4 [shape = 'u8[196608]{0}', space=vmem, size = 0x30000, scoped, tag = 'input window, operand 1, single buffered']
    #allocation5 [shape = 's32[2]{0}', space=sflag, size = 0x8, scoped, tag = 'scoped memory for tcn_encoder_forward.2']
    #allocation6 [shape = 'u8[196608]{0}', space=vmem, size = 0x30000, scoped, tag = 'input window, operand 3, single buffered']
    #allocation7 [shape = 's32[1]{0}', space=sflag, size = 0x4, scoped, tag = 'scoped memory for tcn_encoder_forward.2']
    #allocation8 [shape = 'u8[65536]{0}', space=vmem, size = 0x10000, scoped, tag = 'input window, operand 5, single buffered']
    %12 = vsyncpa [#allocation5], 0
    %13 = vsyncpa [#allocation7], 0
    loop: start=0, step=1, limit=4
    $region2: #{tcn_encoder_forward.2} parent=1 // loop_pre_header
      _
    $region3: #{tcn_encoder_forward.2} parent=1 // loop_header
      %s15 = sphi 0, %s19
      %p16 = scmp.ge.s32.totalorder %s15, 4
      %s25 = sphi 0, %s27
      %s28 = sphi 0, %s25
      %s29 = sphi 0, %s28
      %s45 = sphi 0, %s29
      %s49 = sphi 0, %s49
      %s51 = sphi 0, %s49
      %s52 = sphi 0, %s51
      %s66 = sphi 0, %s52
      %s70 = sphi 0, %s70
      %s72 = sphi 0, %s70
      %s73 = sphi 0, %s72
      %s87 = sphi 0, %s73
      %s91 = sphi 0, %s91
      %s93 = sphi 0, %s91
      %s94 = sphi 0, %s93
      %s108 = sphi 0, %s94
      %s112 = sphi 0, %s112
      %s114 = sphi 0, %s112
      %s115 = sphi 0, %s114
      %s129 = sphi 0, %s115
      %s133 = sphi 0, %s133
      %s135 = sphi 0, %s133
      %s136 = sphi 0, %s135
      %s150 = sphi 0, %s136
      %s154 = sphi 0, %s154
      %s156 = sphi 0, %s154
      %s157 = sphi 0, %s156
      %s171 = sphi 0, %s157
      %s177 = sphi 0, %s179
      %s180 = sphi 0, %s177
      %s181 = sphi 0, %s180
      %s197 = sphi 0, %s181
    $region4: #{tcn_encoder_forward.2} parent=1 // loop_header_branch
      %18 = sbr.rel (%p16) target = $region8
    $region5: #{tcn_encoder_forward.2} parent=1 // loop_body
      %s20 = ssub.s32 %s15, 1
      %s21 = ssub.s32 %s15, 2
      %s22 = sadd.s32 %s15, 1
      %s23 = ssub.s32 %s15, %s22
      %p24 = scmp.eq.s32.totalorder %s23, 0
      %s26 = sadd.s32 %s25, 1
      %s27 = scalar_select %p24, %s25, %s26
      %p30 = pneg %p24
      %p31 = scmp.eq.s32.totalorder %s15, 1
      %p32 = por %p30, %p31
      %p33 = scmp.ne.s32.totalorder %s25, %s28
      %p34 = scmp.eq.s32.totalorder %s15, 0
      %p35 = por %p33, %p34
      %p36 = scmp.ne.s32.totalorder %s25, %s28
      %p37 = scmp.eq.s32.totalorder %s20, 1
      %p38 = por %p36, %p37
      %p39 = scmp.ne.s32.totalorder %s28, %s29
      %p40 = scmp.eq.s32.totalorder %s20, 0
      %p41 = por %p39, %p40
      %p42 = scmp.ne.s32.totalorder %s28, %s29
      %p43 = scmp.eq.s32.totalorder %s21, 1
      %p44 = por %p42, %p43
      %p46 = scmp.ne.s32.totalorder %s29, %s45
      %p47 = scmp.eq.s32.totalorder %s21, 0
      %p48 = por %p46, %p47
      %s50 = sadd.s32 %s49, 1
      %p53 = scmp.eq.s32.totalorder %s15, 1
      %p54 = scmp.ne.s32.totalorder %s49, %s51
      %p55 = scmp.eq.s32.totalorder %s15, 0
      %p56 = por %p54, %p55
      %p57 = scmp.ne.s32.totalorder %s49, %s51
      %p58 = scmp.eq.s32.totalorder %s20, 1
      %p59 = por %p57, %p58
      %p60 = scmp.ne.s32.totalorder %s51, %s52
      %p61 = scmp.eq.s32.totalorder %s20, 0
      %p62 = por %p60, %p61
      %p63 = scmp.ne.s32.totalorder %s51, %s52
      %p64 = scmp.eq.s32.totalorder %s21, 1
      %p65 = por %p63, %p64
      %p67 = scmp.ne.s32.totalorder %s52, %s66
      %p68 = scmp.eq.s32.totalorder %s21, 0
      %p69 = por %p67, %p68
      %s71 = sadd.s32 %s70, 1
      %p74 = scmp.eq.s32.totalorder %s15, 1
      %p75 = scmp.ne.s32.totalorder %s70, %s72
      %p76 = scmp.eq.s32.totalorder %s15, 0
      %p77 = por %p75, %p76
      %p78 = scmp.ne.s32.totalorder %s70, %s72
      %p79 = scmp.eq.s32.totalorder %s20, 1
      %p80 = por %p78, %p79
      %p81 = scmp.ne.s32.totalorder %s72, %s73
      %p82 = scmp.eq.s32.totalorder %s20, 0
      %p83 = por %p81, %p82
      %p84 = scmp.ne.s32.totalorder %s72, %s73
      %p85 = scmp.eq.s32.totalorder %s21, 1
      %p86 = por %p84, %p85
      %p88 = scmp.ne.s32.totalorder %s73, %s87
      %p89 = scmp.eq.s32.totalorder %s21, 0
      %p90 = por %p88, %p89
      %s92 = sadd.s32 %s91, 1
      %p95 = scmp.eq.s32.totalorder %s15, 1
      %p96 = scmp.ne.s32.totalorder %s91, %s93
      %p97 = scmp.eq.s32.totalorder %s15, 0
      %p98 = por %p96, %p97
      %p99 = scmp.ne.s32.totalorder %s91, %s93
      %p100 = scmp.eq.s32.totalorder %s20, 1
      %p101 = por %p99, %p100
      %p102 = scmp.ne.s32.totalorder %s93, %s94
      %p103 = scmp.eq.s32.totalorder %s20, 0
      %p104 = por %p102, %p103
      %p105 = scmp.ne.s32.totalorder %s93, %s94
      %p106 = scmp.eq.s32.totalorder %s21, 1
      %p107 = por %p105, %p106
      %p109 = scmp.ne.s32.totalorder %s94, %s108
      %p110 = scmp.eq.s32.totalorder %s21, 0
      %p111 = por %p109, %p110
      %s113 = sadd.s32 %s112, 1
      %p116 = scmp.eq.s32.totalorder %s15, 1
      %p117 = scmp.ne.s32.totalorder %s112, %s114
      %p118 = scmp.eq.s32.totalorder %s15, 0
      %p119 = por %p117, %p118
      %p120 = scmp.ne.s32.totalorder %s112, %s114
      %p121 = scmp.eq.s32.totalorder %s20, 1
      %p122 = por %p120, %p121
      %p123 = scmp.ne.s32.totalorder %s114, %s115
      %p124 = scmp.eq.s32.totalorder %s20, 0
      %p125 = por %p123, %p124
      %p126 = scmp.ne.s32.totalorder %s114, %s115
      %p127 = scmp.eq.s32.totalorder %s21, 1
      %p128 = por %p126, %p127
      %p130 = scmp.ne.s32.totalorder %s115, %s129
      %p131 = scmp.eq.s32.totalorder %s21, 0
      %p132 = por %p130, %p131
      %s134 = sadd.s32 %s133, 1
      %p137 = scmp.eq.s32.totalorder %s15, 1
      %p138 = scmp.ne.s32.totalorder %s133, %s135
      %p139 = scmp.eq.s32.totalorder %s15, 0
      %p140 = por %p138, %p139
      %p141 = scmp.ne.s32.totalorder %s133, %s135
      %p142 = scmp.eq.s32.totalorder %s20, 1
      %p143 = por %p141, %p142
      %p144 = scmp.ne.s32.totalorder %s135, %s136
      %p145 = scmp.eq.s32.totalorder %s20, 0
      %p146 = por %p144, %p145
      %p147 = scmp.ne.s32.totalorder %s135, %s136
      %p148 = scmp.eq.s32.totalorder %s21, 1
      %p149 = por %p147, %p148
      %p151 = scmp.ne.s32.totalorder %s136, %s150
      %p152 = scmp.eq.s32.totalorder %s21, 0
      %p153 = por %p151, %p152
      %s155 = sadd.s32 %s154, 1
      %p158 = scmp.eq.s32.totalorder %s15, 1
      %p159 = scmp.ne.s32.totalorder %s154, %s156
      %p160 = scmp.eq.s32.totalorder %s15, 0
      %p161 = por %p159, %p160
      %p162 = scmp.ne.s32.totalorder %s154, %s156
      %p163 = scmp.eq.s32.totalorder %s20, 1
      %p164 = por %p162, %p163
      %p165 = scmp.ne.s32.totalorder %s156, %s157
      %p166 = scmp.eq.s32.totalorder %s20, 0
      %p167 = por %p165, %p166
      %p168 = scmp.ne.s32.totalorder %s156, %s157
      %p169 = scmp.eq.s32.totalorder %s21, 1
      %p170 = por %p168, %p169
      %p172 = scmp.ne.s32.totalorder %s157, %s171
      %p173 = scmp.eq.s32.totalorder %s21, 0
      %p174 = por %p172, %p173
      %s175 = ssub.s32 %s15, %s22
      %p176 = scmp.eq.s32.totalorder %s175, 0
      %s178 = sadd.s32 %s177, 1
      %s179 = scalar_select %p176, %s177, %s178
      %p182 = pneg %p176
      %p183 = scmp.eq.s32.totalorder %s15, 1
      %p184 = por %p182, %p183
      %p185 = scmp.ne.s32.totalorder %s177, %s180
      %p186 = scmp.eq.s32.totalorder %s15, 0
      %p187 = por %p185, %p186
      %p188 = scmp.ne.s32.totalorder %s177, %s180
      %p189 = scmp.eq.s32.totalorder %s20, 1
      %p190 = por %p188, %p189
      %p191 = scmp.ne.s32.totalorder %s180, %s181
      %p192 = scmp.eq.s32.totalorder %s20, 0
      %p193 = por %p191, %p192
      %p194 = scmp.ne.s32.totalorder %s180, %s181
      %p195 = scmp.eq.s32.totalorder %s21, 1
      %p196 = por %p194, %p195
      %p198 = scmp.ne.s32.totalorder %s181, %s197
      %p199 = scmp.eq.s32.totalorder %s21, 0
      %p200 = por %p198, %p199
      %p201 = scmp.le.s32.totalorder 1, %s15
      %p202 = scmp.lt.s32.totalorder %s15, 3
      %p203 = pnand %p201, %p202
      %p204 = pneg %p203
      // Predicated region
      $region9: #{tcn_encoder_forward.2} parent=5 // pred_check
        _
      $region10: #{tcn_encoder_forward.2} parent=5 // pred_check_branch
        %206 = sbr.rel (%p203) target = $region12
      $region11: #{tcn_encoder_forward.2} parent=5 // pred_region
        %s207 = ssub.s32 %s15, 1
        // Predicated region
        $region13: #{tcn_encoder_forward.2} parent=11 // pred_check
          %p208 = pneg %p62
        $region14: #{tcn_encoder_forward.2} parent=11 // pred_check_branch
          %210 = sbr.rel (%p208) target = $region16
        $region15: #{tcn_encoder_forward.2} parent=11 // pred_region
          %s212 = ssub.s32 6144, 6144
          %213 = vsyncadd [#allocation5], %s212
          %s214 = sshll.u32 [#allocation4], 4
          %s215 = int_to_ptr.vmem [resolvable:$true] %s214
          %220 = dma.hbm_to_vmem [thread:$0]  %s1, 6144, %s215, [#allocation5], 128, 128, 8
        $region16: #{tcn_encoder_forward.2} parent=11 // pred_fallthru
          _
        // Predicated region
        $region17: #{tcn_encoder_forward.2} parent=11 // pred_check
          %p221 = pneg %p83
        $region18: #{tcn_encoder_forward.2} parent=11 // pred_check_branch
          %223 = sbr.rel (%p221) target = $region20
        $region19: #{tcn_encoder_forward.2} parent=11 // pred_region
          _
        $region20: #{tcn_encoder_forward.2} parent=11 // pred_fallthru
          _
        // Predicated region
        $region21: #{tcn_encoder_forward.2} parent=11 // pred_check
          %p224 = pneg %p104
        $region22: #{tcn_encoder_forward.2} parent=11 // pred_check_branch
          %226 = sbr.rel (%p224) target = $region24
        $region23: #{tcn_encoder_forward.2} parent=11 // pred_region
          %s228 = ssub.s32 6144, 6144
          %229 = vsyncadd [#allocation7], %s228
          %s230 = sshll.u32 [#allocation6], 4
          %s231 = int_to_ptr.vmem [resolvable:$true] %s230
          %236 = dma.hbm_to_vmem [thread:$0]  %s3, 6144, %s231, [#allocation7], 128, 128, 8
        $region24: #{tcn_encoder_forward.2} parent=11 // pred_fallthru
          _
        // Predicated region
        $region25: #{tcn_encoder_forward.2} parent=11 // pred_check
          %p237 = pneg %p125
        $region26: #{tcn_encoder_forward.2} parent=11 // pred_check_branch
          %239 = sbr.rel (%p237) target = $region28
        $region27: #{tcn_encoder_forward.2} parent=11 // pred_region
          _
        $region28: #{tcn_encoder_forward.2} parent=11 // pred_fallthru
          _
        // Predicated region
        $region29: #{tcn_encoder_forward.2} parent=11 // pred_check
          %p240 = pneg %p146
        $region30: #{tcn_encoder_forward.2} parent=11 // pred_check_branch
          %242 = sbr.rel (%p240) target = $region32
        $region31: #{tcn_encoder_forward.2} parent=11 // pred_region
          %s244 = ssub.s32 2048, 2048
          %245 = vsyncadd [#allocation7], %s244
          %s246 = sshll.u32 [#allocation8], 4
          %s247 = int_to_ptr.vmem [resolvable:$true] %s246
          %252 = dma.hbm_to_vmem [thread:$0]  %s5, 2048, %s247, [#allocation7], 128, 128, 8
        $region32: #{tcn_encoder_forward.2} parent=11 // pred_fallthru
          _
        // Predicated region
        $region33: #{tcn_encoder_forward.2} parent=11 // pred_check
          %p253 = pneg %p167
        $region34: #{tcn_encoder_forward.2} parent=11 // pred_check_branch
          %255 = sbr.rel (%p253) target = $region36
        $region35: #{tcn_encoder_forward.2} parent=11 // pred_region
          _
        $region36: #{tcn_encoder_forward.2} parent=11 // pred_fallthru
          _
      $region12: #{tcn_encoder_forward.2} parent=5 // pred_fallthru
        _
      %p256 = scmp.lt.s32.totalorder %s15, 2
      // Predicated region
      $region37: #{tcn_encoder_forward.2} parent=5 // pred_check
        %p257 = pneg %p256
      $region38: #{tcn_encoder_forward.2} parent=5 // pred_check_branch
        %259 = sbr.rel (%p257) target = $region40
      $region39: #{tcn_encoder_forward.2} parent=5 // pred_region
        // Predicated region
        $region41: #{tcn_encoder_forward.2} parent=39 // pred_check
          %p260 = pneg %p35
        $region42: #{tcn_encoder_forward.2} parent=39 // pred_check_branch
          %262 = sbr.rel (%p260) target = $region44
        $region43: #{tcn_encoder_forward.2} parent=39 // pred_region
          %p263 = scmp.lt.s32.totalorder %s15, 1
          %s264 = scalar_select %p263, %s15, 1
          %s265 = smul.addr %s264, 2
          %s266 = smul.addr %s265, 8
          %s267 = scalar_lea.vmem %s0, %s266
        $region44: #{tcn_encoder_forward.2} parent=39 // pred_fallthru
          _
      $region40: #{tcn_encoder_forward.2} parent=5 // pred_fallthru
        _
      %p268 = scmp.le.s32.totalorder 1, %s15
      %p269 = scmp.lt.s32.totalorder %s15, 3
      %p270 = pnand %p268, %p269
      %p271 = pneg %p270
      // Predicated region
      $region45: #{tcn_encoder_forward.2} parent=5 // pred_check
        _
      $region46: #{tcn_encoder_forward.2} parent=5 // pred_check_branch
        %273 = sbr.rel (%p270) target = $region48
      $region47: #{tcn_encoder_forward.2} parent=5 // pred_region
        %s274 = ssub.s32 %s15, 1
        // Predicated region
        $region49: #{tcn_encoder_forward.2} parent=47 // pred_check
          %p275 = pneg %p62
        $region50: #{tcn_encoder_forward.2} parent=47 // pred_check_branch
          %277 = sbr.rel (%p275) target = $region52
        $region51: #{tcn_encoder_forward.2} parent=47 // pred_region
          %278 = dma.done [#allocation5], 6144
        $region52: #{tcn_encoder_forward.2} parent=47 // pred_fallthru
          _
        // Predicated region
        $region53: #{tcn_encoder_forward.2} parent=47 // pred_check
          %p279 = pneg %p104
        $region54: #{tcn_encoder_forward.2} parent=47 // pred_check_branch
          %281 = sbr.rel (%p279) target = $region56
        $region55: #{tcn_encoder_forward.2} parent=47 // pred_region
          %282 = dma.done [#allocation7], 6144
        $region56: #{tcn_encoder_forward.2} parent=47 // pred_fallthru
          _
        // Predicated region
        $region57: #{tcn_encoder_forward.2} parent=47 // pred_check
          %p283 = pneg %p146
        $region58: #{tcn_encoder_forward.2} parent=47 // pred_check_branch
          %285 = sbr.rel (%p283) target = $region60
        $region59: #{tcn_encoder_forward.2} parent=47 // pred_region
          %286 = dma.done [#allocation7], 2048
        $region60: #{tcn_encoder_forward.2} parent=47 // pred_fallthru
          _
        %p287 = scmp.lt.s32.totalorder %s20, 1
        %s288 = scalar_select %p287, %s20, 1
        %s289 = smul.addr %s288, 2
        %s290 = smul.addr %s289, 8
        %s291 = scalar_lea.vmem %s0, %s290
        %p292 = pneg %p41
        %p293 = pneg %p38
        %p294 = pneg %p62
        %p295 = pneg %p59
        %p296 = pneg %p83
        %p297 = pneg %p80
        %p298 = pneg %p104
        %p299 = pneg %p101
        %p300 = pneg %p125
        %p301 = pneg %p122
        %p302 = pneg %p146
        %p303 = pneg %p143
        %p304 = pneg %p167
        %p305 = pneg %p164
        %p306 = pneg %p193
        %p307 = pneg %p190
        %p308 = scmp.lt.s32.totalorder %s20, 1
        %s309 = scalar_select %p308, %s20, 1
        %s310 = smul.addr %s309, 2
        %s311 = smul.addr %s310, 8
        %s312 = scalar_lea.vmem %s7, %s311
        %p313 = scmp.lt.s32.totalorder %s20, 1
        %s314 = scalar_select %p313, %s20, 1
        %s315 = smul.addr %s314, 2
        %s316 = smul.addr %s315, 8
        %s317 = scalar_lea.vmem %s0, %s316
        %p318 = scmp.lt.s32.totalorder %s20, 1
        %s319 = scalar_select %p318, %s20, 1
        %s320 = smul.addr %s319, 2
        %s321 = smul.addr %s320, 8
        %s322 = scalar_lea.vmem %s7, %s321
        %323 = vst [vmem:[#allocation2] sm:$0xff] 0.0
        %324 = vst [vmem:[#allocation3] sm:$0xff] 0.0
        %v325 = vld [vmem:[%s317] sm:$0xff]
        %v326 = vld [vmem:[%s317 + $0x8] sm:$0xff]
        %327 = vst [vmem:[#allocation2 + $0x8] sm:$0xff] %v325
        %328 = vst [vmem:[#allocation2 + $0x10] sm:$0xff] %v326
        %v329 = vld [vmem:[%s2] sm:$0x1]
        %v331 = vlaneseq
        %v332 = vshrl.u32 %v331, 7
        %v333 = vsub.s32 0, %v332
        %v334 = vrot.slane %v329, %v333
        %v336 = vld [vmem:[#allocation2 + $0x6] sm:$0xff]
        %v337 = vld [vmem:[#allocation2 + $0xe] sm:$0xff]
        %v338 = vld [vmem:[#allocation4] sm:$0xff]
        %v339 = vld [vmem:[#allocation4 + $0x8] sm:$0xff]
        %v340 = vld [vmem:[#allocation4 + $0x10] sm:$0xff]
        %v341 = vld [vmem:[#allocation4 + $0x18] sm:$0xff]
        %v342 = vld [vmem:[#allocation4 + $0x20] sm:$0xff]
        %v343 = vld [vmem:[#allocation4 + $0x28] sm:$0xff]
        %v344 = vld [vmem:[#allocation4 + $0x30] sm:$0xff]
        %v345 = vld [vmem:[#allocation4 + $0x38] sm:$0xff]
        %v346 = vld [vmem:[#allocation4 + $0x40] sm:$0xff]
        %v347 = vld [vmem:[#allocation4 + $0x48] sm:$0xff]
        %v348 = vld [vmem:[#allocation4 + $0x50] sm:$0xff]
        %v349 = vld [vmem:[#allocation4 + $0x58] sm:$0xff]
        %v350 = vld [vmem:[#allocation4 + $0x60] sm:$0xff]
        %v351 = vld [vmem:[#allocation4 + $0x68] sm:$0xff]
        %v352 = vld [vmem:[#allocation4 + $0x70] sm:$0xff]
        %v353 = vld [vmem:[#allocation4 + $0x78] sm:$0xff]
        %354 = vmatprep.subr.mxu0 0.0
        %355 = vmatpush1.msra.mxu0 %v338
        %356 = vmatprep.subr.mxu0 0.0
        %357 = vmatpush1.msra.mxu0 %v339
        %358 = vmatprep.subr.mxu0 0.0
        %359 = vmatpush1.msra.mxu0 %v340
        %360 = vmatprep.subr.mxu0 0.0
        %361 = vmatpush1.msra.mxu0 %v341
        %362 = vmatprep.subr.mxu0 0.0
        %363 = vmatpush1.msra.mxu0 %v342
        %364 = vmatprep.subr.mxu0 0.0
        %365 = vmatpush1.msra.mxu0 %v343
        %366 = vmatprep.subr.mxu0 0.0
        %367 = vmatpush1.msra.mxu0 %v344
        %368 = vmatprep.subr.mxu0 0.0
        %369 = vmatpush1.msra.mxu0 %v345
        %370 = vmatprep.subr.mxu0 0.0
        %371 = vmatpush1.msra.mxu0 %v346
        %372 = vmatprep.subr.mxu0 0.0
        %373 = vmatpush1.msra.mxu0 %v347
        %374 = vmatprep.subr.mxu0 0.0
        %375 = vmatpush1.msra.mxu0 %v348
        %376 = vmatprep.subr.mxu0 0.0
        %377 = vmatpush1.msra.mxu0 %v349
        %378 = vmatprep.subr.mxu0 0.0
        %379 = vmatpush1.msra.mxu0 %v350
        %380 = vmatprep.subr.mxu0 0.0
        %381 = vmatpush1.msra.mxu0 %v351
        %382 = vmatprep.subr.mxu0 0.0
        %383 = vmatpush1.msra.mxu0 %v352
        %384 = vmatprep.subr.mxu0 0.0
        %385 = vmatpush1.msra.mxu0 %v353
        %386 = vmatprep.subr.mxu0 0.0
        %387 = vmatpush1.msra.mxu0 0.0
        %388 = vmatprep.subr.mxu0 0.0
        %389 = vmatpush1.msra.mxu0 0.0
        %390 = vmatprep.subr.mxu0 0.0
        %391 = vmatpush1.msra.mxu0 0.0
        %392 = vmatprep.subr.mxu0 0.0
        %393 = vmatpush1.msra.mxu0 0.0
        %394 = vmatprep.subr.mxu0 0.0
        %395 = vmatpush1.msra.mxu0 0.0
        %396 = vmatprep.subr.mxu0 0.0
        %397 = vmatpush1.msra.mxu0 0.0
        %398 = vmatprep.subr.mxu0 0.0
        %399 = vmatpush1.msra.mxu0 0.0
        %400 = vmatprep.subr.mxu0 0.0
        %401 = vmatpush1.msra.mxu0 0.0
        %402 = vmatprep.subr.mxu0 0.0
        %403 = vmatpush1.msra.mxu0 0.0
        %404 = vmatprep.subr.mxu0 0.0
        %405 = vmatpush1.msra.mxu0 0.0
        %406 = vmatprep.subr.mxu0 0.0
        %407 = vmatpush1.msra.mxu0 0.0
        %408 = vmatprep.subr.mxu0 0.0
        %409 = vmatpush1.msra.mxu0 0.0
        %410 = vmatprep.subr.mxu0 0.0
        %411 = vmatpush1.msra.mxu0 0.0
        %412 = vmatprep.subr.mxu0 0.0
        %413 = vmatpush1.msra.mxu0 0.0
        %414 = vmatprep.subr.mxu0 0.0
        %415 = vmatpush1.msra.mxu0 0.0
        %416 = vmatprep.subr.mxu0 0.0
        %417 = vmatpush1.msra.mxu0 0.0
        %418 = vmatprep.mubr.f32.mxu0 0.0
        %419 = vmatmul.mubr.f32.gmra.mrb[0].mxu0 %v336
        %v420 = vpop.f32.mrb[0].mxu0
        %v421 = vadd.f32 0.0, %v420
        %v422 = vpop.f32.mrb[0].mxu0
        %423 = vmatprep.mubr.f32.mxu0 0.0
        %424 = vmatmul.mubr.f32.gmra.mrb[0].mxu0 %v337
        %v425 = vpop.f32.mrb[0].mxu0
        %v426 = vadd.f32 0.0, %v425
        %v427 = vpop.f32.mrb[0].mxu0
        %428 = vdwg.mxu0
        %v429 = vadd.f32 %v334, %v421
        %v430 = vadd.f32 %v334, %v426
        %v431 = vld [vmem:[#allocation2 + $0x7] sm:$0xff]
        %v432 = vld [vmem:[#allocation2 + $0xf] sm:$0xff]
        %s433 = scalar_lea.vmem [#allocation4], 128
        %v434 = vld [vmem:[%s433] sm:$0xff]
        %v435 = vld [vmem:[%s433 + $0x8] sm:$0xff]
        %v436 = vld [vmem:[%s433 + $0x10] sm:$0xff]
        %v437 = vld [vmem:[%s433 + $0x18] sm:$0xff]
        %v438 = vld [vmem:[%s433 + $0x20] sm:$0xff]
        %v439 = vld [vmem:[%s433 + $0x28] sm:$0xff]
        %v440 = vld [vmem:[%s433 + $0x30] sm:$0xff]
        %v441 = vld [vmem:[%s433 + $0x38] sm:$0xff]
        %v442 = vld [vmem:[%s433 + $0x40] sm:$0xff]
        %v443 = vld [vmem:[%s433 + $0x48] sm:$0xff]
        %v444 = vld [vmem:[%s433 + $0x50] sm:$0xff]
        %v445 = vld [vmem:[%s433 + $0x58] sm:$0xff]
        %v446 = vld [vmem:[%s433 + $0x60] sm:$0xff]
        %v447 = vld [vmem:[%s433 + $0x68] sm:$0xff]
        %v448 = vld [vmem:[%s433 + $0x70] sm:$0xff]
        %v449 = vld [vmem:[%s433 + $0x78] sm:$0xff]
        %450 = vmatprep.subr.mxu0 0.0
        %451 = vmatpush1.msra.mxu0 %v434
        %452 = vmatprep.subr.mxu0 0.0
        %453 = vmatpush1.msra.mxu0 %v435
        %454 = vmatprep.subr.mxu0 0.0
        %455 = vmatpush1.msra.mxu0 %v436
        %456 = vmatprep.subr.mxu0 0.0
        %457 = vmatpush1.msra.mxu0 %v437
        %458 = vmatprep.subr.mxu0 0.0
        %459 = vmatpush1.msra.mxu0 %v438
        %460 = vmatprep.subr.mxu0 0.0
        %461 = vmatpush1.msra.mxu0 %v439
        %462 = vmatprep.subr.mxu0 0.0
        %463 = vmatpush1.msra.mxu0 %v440
        %464 = vmatprep.subr.mxu0 0.0
        %465 = vmatpush1.msra.mxu0 %v441
        %466 = vmatprep.subr.mxu0 0.0
        %467 = vmatpush1.msra.mxu0 %v442
        %468 = vmatprep.subr.mxu0 0.0
        %469 = vmatpush1.msra.mxu0 %v443
        %470 = vmatprep.subr.mxu0 0.0
        %471 = vmatpush1.msra.mxu0 %v444
        %472 = vmatprep.subr.mxu0 0.0
        %473 = vmatpush1.msra.mxu0 %v445
        %474 = vmatprep.subr.mxu0 0.0
        %475 = vmatpush1.msra.mxu0 %v446
        %476 = vmatprep.subr.mxu0 0.0
        %477 = vmatpush1.msra.mxu0 %v447
        %478 = vmatprep.subr.mxu0 0.0
        %479 = vmatpush1.msra.mxu0 %v448
        %480 = vmatprep.subr.mxu0 0.0
        %481 = vmatpush1.msra.mxu0 %v449
        %482 = vmatprep.subr.mxu0 0.0
        %483 = vmatpush1.msra.mxu0 0.0
        %484 = vmatprep.subr.mxu0 0.0
        %485 = vmatpush1.msra.mxu0 0.0
        %486 = vmatprep.subr.mxu0 0.0
        %487 = vmatpush1.msra.mxu0 0.0
        %488 = vmatprep.subr.mxu0 0.0
        %489 = vmatpush1.msra.mxu0 0.0
        %490 = vmatprep.subr.mxu0 0.0
        %491 = vmatpush1.msra.mxu0 0.0
        %492 = vmatprep.subr.mxu0 0.0
        %493 = vmatpush1.msra.mxu0 0.0
        %494 = vmatprep.subr.mxu0 0.0
        %495 = vmatpush1.msra.mxu0 0.0
        %496 = vmatprep.subr.mxu0 0.0
        %497 = vmatpush1.msra.mxu0 0.0
        %498 = vmatprep.subr.mxu0 0.0
        %499 = vmatpush1.msra.mxu0 0.0
        %500 = vmatprep.subr.mxu0 0.0
        %501 = vmatpush1.msra.mxu0 0.0
        %502 = vmatprep.subr.mxu0 0.0
        %503 = vmatpush1.msra.mxu0 0.0
        %504 = vmatprep.subr.mxu0 0.0
        %505 = vmatpush1.msra.mxu0 0.0
        %506 = vmatprep.subr.mxu0 0.0
        %507 = vmatpush1.msra.mxu0 0.0
        %508 = vmatprep.subr.mxu0 0.0
        %509 = vmatpush1.msra.mxu0 0.0
        %510 = vmatprep.subr.mxu0 0.0
        %511 = vmatpush1.msra.mxu0 0.0
        %512 = vmatprep.subr.mxu0 0.0
        %513 = vmatpush1.msra.mxu0 0.0
        %514 = vmatprep.mubr.f32.mxu0 0.0
        %515 = vmatmul.mubr.f32.gmra.mrb[0].mxu0 %v431
        %v516 = vpop.f32.mrb[0].mxu0
        %v517 = vadd.f32 0.0, %v516
        %v518 = vpop.f32.mrb[0].mxu0
        %519 = vmatprep.mubr.f32.mxu0 0.0
        %520 = vmatmul.mubr.f32.gmra.mrb[0].mxu0 %v432
        %v521 = vpop.f32.mrb[0].mxu0
        %v522 = vadd.f32 0.0, %v521
        %v523 = vpop.f32.mrb[0].mxu0
        %524 = vdwg.mxu0
        %v525 = vadd.f32 %v429, %v517
        %v526 = vadd.f32 %v430, %v522
        %v527 = vld [vmem:[#allocation2 + $0x8] sm:$0xff]
        %v528 = vld [vmem:[#allocation2 + $0x10] sm:$0xff]
        %s529 = scalar_lea.vmem [#allocation4], 256
        %v530 = vld [vmem:[%s529] sm:$0xff]
        %v531 = vld [vmem:[%s529 + $0x8] sm:$0xff]
        %v532 = vld [vmem:[%s529 + $0x10] sm:$0xff]
        %v533 = vld [vmem:[%s529 + $0x18] sm:$0xff]
        %v534 = vld [vmem:[%s529 + $0x20] sm:$0xff]
        %v535 = vld [vmem:[%s529 + $0x28] sm:$0xff]
        %v536 = vld [vmem:[%s529 + $0x30] sm:$0xff]
        %v537 = vld [vmem:[%s529 + $0x38] sm:$0xff]
        %v538 = vld [vmem:[%s529 + $0x40] sm:$0xff]
        %v539 = vld [vmem:[%s529 + $0x48] sm:$0xff]
        %v540 = vld [vmem:[%s529 + $0x50] sm:$0xff]
        %v541 = vld [vmem:[%s529 + $0x58] sm:$0xff]
        %v542 = vld [vmem:[%s529 + $0x60] sm:$0xff]
        %v543 = vld [vmem:[%s529 + $0x68] sm:$0xff]
        %v544 = vld [vmem:[%s529 + $0x70] sm:$0xff]
        %v545 = vld [vmem:[%s529 + $0x78] sm:$0xff]
        %546 = vmatprep.subr.mxu0 0.0
        %547 = vmatpush1.msra.mxu0 %v530
        %548 = vmatprep.subr.mxu0 0.0
        %549 = vmatpush1.msra.mxu0 %v531
        %550 = vmatprep.subr.mxu0 0.0
        %551 = vmatpush1.msra.mxu0 %v532
        %552 = vmatprep.subr.mxu0 0.0
        %553 = vmatpush1.msra.mxu0 %v533
        %554 = vmatprep.subr.mxu0 0.0
        %555 = vmatpush1.msra.mxu0 %v534
        %556 = vmatprep.subr.mxu0 0.0
        %557 = vmatpush1.msra.mxu0 %v535
        %558 = vmatprep.subr.mxu0 0.0
        %559 = vmatpush1.msra.mxu0 %v536
        %560 = vmatprep.subr.mxu0 0.0
        %561 = vmatpush1.msra.mxu0 %v537
        %562 = vmatprep.subr.mxu0 0.0
        %563 = vmatpush1.msra.mxu0 %v538
        %564 = vmatprep.subr.mxu0 0.0
        %565 = vmatpush1.msra.mxu0 %v539
        %566 = vmatprep.subr.mxu0 0.0
        %567 = vmatpush1.msra.mxu0 %v540
        %568 = vmatprep.subr.mxu0 0.0
        %569 = vmatpush1.msra.mxu0 %v541
        %570 = vmatprep.subr.mxu0 0.0
        %571 = vmatpush1.msra.mxu0 %v542
        %572 = vmatprep.subr.mxu0 0.0
        %573 = vmatpush1.msra.mxu0 %v543
        %574 = vmatprep.subr.mxu0 0.0
        %575 = vmatpush1.msra.mxu0 %v544
        %576 = vmatprep.subr.mxu0 0.0
        %577 = vmatpush1.msra.mxu0 %v545
        %578 = vmatprep.subr.mxu0 0.0
        %579 = vmatpush1.msra.mxu0 0.0
        %580 = vmatprep.subr.mxu0 0.0
        %581 = vmatpush1.msra.mxu0 0.0
        %582 = vmatprep.subr.mxu0 0.0
        %583 = vmatpush1.msra.mxu0 0.0
        %584 = vmatprep.subr.mxu0 0.0
        %585 = vmatpush1.msra.mxu0 0.0
        %586 = vmatprep.subr.mxu0 0.0
        %587 = vmatpush1.msra.mxu0 0.0
        %588 = vmatprep.subr.mxu0 0.0
        %589 = vmatpush1.msra.mxu0 0.0
        %590 = vmatprep.subr.mxu0 0.0
        %591 = vmatpush1.msra.mxu0 0.0
        %592 = vmatprep.subr.mxu0 0.0
        %593 = vmatpush1.msra.mxu0 0.0
        %594 = vmatprep.subr.mxu0 0.0
        %595 = vmatpush1.msra.mxu0 0.0
        %596 = vmatprep.subr.mxu0 0.0
        %597 = vmatpush1.msra.mxu0 0.0
        %598 = vmatprep.subr.mxu0 0.0
        %599 = vmatpush1.msra.mxu0 0.0
        %600 = vmatprep.subr.mxu0 0.0
        %601 = vmatpush1.msra.mxu0 0.0
        %602 = vmatprep.subr.mxu0 0.0
        %603 = vmatpush1.msra.mxu0 0.0
        %604 = vmatprep.subr.mxu0 0.0
        %605 = vmatpush1.msra.mxu0 0.0
        %606 = vmatprep.subr.mxu0 0.0
        %607 = vmatpush1.msra.mxu0 0.0
        %608 = vmatprep.subr.mxu0 0.0
        %609 = vmatpush1.msra.mxu0 0.0
        %610 = vmatprep.mubr.f32.mxu0 0.0
        %611 = vmatmul.mubr.f32.gmra.mrb[0].mxu0 %v527
        %v612 = vpop.f32.mrb[0].mxu0
        %v613 = vadd.f32 0.0, %v612
        %v614 = vpop.f32.mrb[0].mxu0
        %615 = vmatprep.mubr.f32.mxu0 0.0
        %616 = vmatmul.mubr.f32.gmra.mrb[0].mxu0 %v528
        %v617 = vpop.f32.mrb[0].mxu0
        %v618 = vadd.f32 0.0, %v617
        %v619 = vpop.f32.mrb[0].mxu0
        %620 = vdwg.mxu0
        %v621 = vadd.f32 %v525, %v613
        %v622 = vadd.f32 %v526, %v618
        %v623 = vmax.f32 %v621, 0.0
        %v624 = vmax.f32 %v622, 0.0
        %625 = vst [vmem:[#allocation3 + $0x8] sm:$0xff] %v623
        %626 = vst [vmem:[#allocation3 + $0x10] sm:$0xff] %v624
        %v627 = vld [vmem:[%s317] sm:$0xff]
        %v628 = vld [vmem:[%s317 + $0x8] sm:$0xff]
        %v629 = vld [vmem:[#allocation8] sm:$0xff]
        %v630 = vld [vmem:[#allocation8 + $0x8] sm:$0xff]
        %v631 = vld [vmem:[#allocation8 + $0x10] sm:$0xff]
        %v632 = vld [vmem:[#allocation8 + $0x18] sm:$0xff]
        %v633 = vld [vmem:[#allocation8 + $0x20] sm:$0xff]
        %v634 = vld [vmem:[#allocation8 + $0x28] sm:$0xff]
        %v635 = vld [vmem:[#allocation8 + $0x30] sm:$0xff]
        %v636 = vld [vmem:[#allocation8 + $0x38] sm:$0xff]
        %v637 = vld [vmem:[#allocation8 + $0x40] sm:$0xff]
        %v638 = vld [vmem:[#allocation8 + $0x48] sm:$0xff]
        %v639 = vld [vmem:[#allocation8 + $0x50] sm:$0xff]
        %v640 = vld [vmem:[#allocation8 + $0x58] sm:$0xff]
        %v641 = vld [vmem:[#allocation8 + $0x60] sm:$0xff]
        %v642 = vld [vmem:[#allocation8 + $0x68] sm:$0xff]
        %v643 = vld [vmem:[#allocation8 + $0x70] sm:$0xff]
        %v644 = vld [vmem:[#allocation8 + $0x78] sm:$0xff]
        %v645 = vld [vmem:[%s6] sm:$0x1]
        %v647 = vlaneseq
        %v648 = vshrl.u32 %v647, 7
        %v649 = vsub.s32 0, %v648
        %v650 = vrot.slane %v645, %v649
        %652 = vmatprep.subr.mxu0 0.0
        %653 = vmatpush1.msra.mxu0 %v629
        %654 = vmatprep.subr.mxu0 0.0
        %655 = vmatpush1.msra.mxu0 %v630
        %656 = vmatprep.subr.mxu0 0.0
        %657 = vmatpush1.msra.mxu0 %v631
        %658 = vmatprep.subr.mxu0 0.0
        %659 = vmatpush1.msra.mxu0 %v632
        %660 = vmatprep.subr.mxu0 0.0
        %661 = vmatpush1.msra.mxu0 %v633
        %662 = vmatprep.subr.mxu0 0.0
        %663 = vmatpush1.msra.mxu0 %v634
        %664 = vmatprep.subr.mxu0 0.0
        %665 = vmatpush1.msra.mxu0 %v635
        %666 = vmatprep.subr.mxu0 0.0
        %667 = vmatpush1.msra.mxu0 %v636
        %668 = vmatprep.subr.mxu0 0.0
        %669 = vmatpush1.msra.mxu0 %v637
        %670 = vmatprep.subr.mxu0 0.0
        %671 = vmatpush1.msra.mxu0 %v638
        %672 = vmatprep.subr.mxu0 0.0
        %673 = vmatpush1.msra.mxu0 %v639
        %674 = vmatprep.subr.mxu0 0.0
        %675 = vmatpush1.msra.mxu0 %v640
        %676 = vmatprep.subr.mxu0 0.0
        %677 = vmatpush1.msra.mxu0 %v641
        %678 = vmatprep.subr.mxu0 0.0
        %679 = vmatpush1.msra.mxu0 %v642
        %680 = vmatprep.subr.mxu0 0.0
        %681 = vmatpush1.msra.mxu0 %v643
        %682 = vmatprep.subr.mxu0 0.0
        %683 = vmatpush1.msra.mxu0 %v644
        %684 = vmatprep.subr.mxu0 0.0
        %685 = vmatpush1.msra.mxu0 0.0
        %686 = vmatprep.subr.mxu0 0.0
        %687 = vmatpush1.msra.mxu0 0.0
        %688 = vmatprep.subr.mxu0 0.0
        %689 = vmatpush1.msra.mxu0 0.0
        %690 = vmatprep.subr.mxu0 0.0
        %691 = vmatpush1.msra.mxu0 0.0
        %692 = vmatprep.subr.mxu0 0.0
        %693 = vmatpush1.msra.mxu0 0.0
        %694 = vmatprep.subr.mxu0 0.0
        %695 = vmatpush1.msra.mxu0 0.0
        %696 = vmatprep.subr.mxu0 0.0
        %697 = vmatpush1.msra.mxu0 0.0
        %698 = vmatprep.subr.mxu0 0.0
        %699 = vmatpush1.msra.mxu0 0.0
        %700 = vmatprep.subr.mxu0 0.0
        %701 = vmatpush1.msra.mxu0 0.0
        %702 = vmatprep.subr.mxu0 0.0
        %703 = vmatpush1.msra.mxu0 0.0
        %704 = vmatprep.subr.mxu0 0.0
        %705 = vmatpush1.msra.mxu0 0.0
        %706 = vmatprep.subr.mxu0 0.0
        %707 = vmatpush1.msra.mxu0 0.0
        %708 = vmatprep.subr.mxu0 0.0
        %709 = vmatpush1.msra.mxu0 0.0
        %710 = vmatprep.subr.mxu0 0.0
        %711 = vmatpush1.msra.mxu0 0.0
        %712 = vmatprep.subr.mxu0 0.0
        %713 = vmatpush1.msra.mxu0 0.0
        %714 = vmatprep.subr.mxu0 0.0
        %715 = vmatpush1.msra.mxu0 0.0
        %716 = vmatprep.mubr.f32.mxu0 0.0
        %717 = vmatmul.mubr.f32.gmra.mrb[0].mxu0 %v627
        %v718 = vpop.f32.mrb[0].mxu0
        %v719 = vadd.f32 %v650, %v718
        %v720 = vpop.f32.mrb[0].mxu0
        %721 = vmatprep.mubr.f32.mxu0 0.0
        %722 = vmatmul.mubr.f32.gmra.mrb[0].mxu0 %v628
        %v723 = vpop.f32.mrb[0].mxu0
        %v724 = vadd.f32 %v650, %v723
        %v725 = vpop.f32.mrb[0].mxu0
        %726 = vdwg.mxu0
        %v727 = vld [vmem:[%s4] sm:$0x1]
        %v729 = vlaneseq
        %v730 = vshrl.u32 %v729, 7
        %v731 = vsub.s32 0, %v730
        %v732 = vrot.slane %v727, %v731
        %v734 = vld [vmem:[#allocation3 + $0x6] sm:$0xff]
        %v735 = vld [vmem:[#allocation3 + $0xe] sm:$0xff]
        %v736 = vld [vmem:[#allocation6] sm:$0xff]
        %v737 = vld [vmem:[#allocation6 + $0x8] sm:$0xff]
        %v738 = vld [vmem:[#allocation6 + $0x10] sm:$0xff]
        %v739 = vld [vmem:[#allocation6 + $0x18] sm:$0xff]
        %v740 = vld [vmem:[#allocation6 + $0x20] sm:$0xff]
        %v741 = vld [vmem:[#allocation6 + $0x28] sm:$0xff]
        %v742 = vld [vmem:[#allocation6 + $0x30] sm:$0xff]
        %v743 = vld [vmem:[#allocation6 + $0x38] sm:$0xff]
        %v744 = vld [vmem:[#allocation6 + $0x40] sm:$0xff]
        %v745 = vld [vmem:[#allocation6 + $0x48] sm:$0xff]
        %v746 = vld [vmem:[#allocation6 + $0x50] sm:$0xff]
        %v747 = vld [vmem:[#allocation6 + $0x58] sm:$0xff]
        %v748 = vld [vmem:[#allocation6 + $0x60] sm:$0xff]
        %v749 = vld [vmem:[#allocation6 + $0x68] sm:$0xff]
        %v750 = vld [vmem:[#allocation6 + $0x70] sm:$0xff]
        %v751 = vld [vmem:[#allocation6 + $0x78] sm:$0xff]
        %752 = vmatprep.subr.mxu0 0.0
        %753 = vmatpush1.msra.mxu0 %v736
        %754 = vmatprep.subr.mxu0 0.0
        %755 = vmatpush1.msra.mxu0 %v737
        %756 = vmatprep.subr.mxu0 0.0
        %757 = vmatpush1.msra.mxu0 %v738
        %758 = vmatprep.subr.mxu0 0.0
        %759 = vmatpush1.msra.mxu0 %v739
        %760 = vmatprep.subr.mxu0 0.0
        %761 = vmatpush1.msra.mxu0 %v740
        %762 = vmatprep.subr.mxu0 0.0
        %763 = vmatpush1.msra.mxu0 %v741
        %764 = vmatprep.subr.mxu0 0.0
        %765 = vmatpush1.msra.mxu0 %v742
        %766 = vmatprep.subr.mxu0 0.0
        %767 = vmatpush1.msra.mxu0 %v743
        %768 = vmatprep.subr.mxu0 0.0
        %769 = vmatpush1.msra.mxu0 %v744
        %770 = vmatprep.subr.mxu0 0.0
        %771 = vmatpush1.msra.mxu0 %v745
        %772 = vmatprep.subr.mxu0 0.0
        %773 = vmatpush1.msra.mxu0 %v746
        %774 = vmatprep.subr.mxu0 0.0
        %775 = vmatpush1.msra.mxu0 %v747
        %776 = vmatprep.subr.mxu0 0.0
        %777 = vmatpush1.msra.mxu0 %v748
        %778 = vmatprep.subr.mxu0 0.0
        %779 = vmatpush1.msra.mxu0 %v749
        %780 = vmatprep.subr.mxu0 0.0
        %781 = vmatpush1.msra.mxu0 %v750
        %782 = vmatprep.subr.mxu0 0.0
        %783 = vmatpush1.msra.mxu0 %v751
        %784 = vmatprep.subr.mxu0 0.0
        %785 = vmatpush1.msra.mxu0 0.0
        %786 = vmatprep.subr.mxu0 0.0
        %787 = vmatpush1.msra.mxu0 0.0
        %788 = vmatprep.subr.mxu0 0.0
        %789 = vmatpush1.msra.mxu0 0.0
        %790 = vmatprep.subr.mxu0 0.0
        %791 = vmatpush1.msra.mxu0 0.0
        %792 = vmatprep.subr.mxu0 0.0
        %793 = vmatpush1.msra.mxu0 0.0
        %794 = vmatprep.subr.mxu0 0.0
        %795 = vmatpush1.msra.mxu0 0.0
        %796 = vmatprep.subr.mxu0 0.0
        %797 = vmatpush1.msra.mxu0 0.0
        %798 = vmatprep.subr.mxu0 0.0
        %799 = vmatpush1.msra.mxu0 0.0
        %800 = vmatprep.subr.mxu0 0.0
        %801 = vmatpush1.msra.mxu0 0.0
        %802 = vmatprep.subr.mxu0 0.0
        %803 = vmatpush1.msra.mxu0 0.0
        %804 = vmatprep.subr.mxu0 0.0
        %805 = vmatpush1.msra.mxu0 0.0
        %806 = vmatprep.subr.mxu0 0.0
        %807 = vmatpush1.msra.mxu0 0.0
        %808 = vmatprep.subr.mxu0 0.0
        %809 = vmatpush1.msra.mxu0 0.0
        %810 = vmatprep.subr.mxu0 0.0
        %811 = vmatpush1.msra.mxu0 0.0
        %812 = vmatprep.subr.mxu0 0.0
        %813 = vmatpush1.msra.mxu0 0.0
        %814 = vmatprep.subr.mxu0 0.0
        %815 = vmatpush1.msra.mxu0 0.0
        %816 = vmatprep.mubr.f32.mxu0 0.0
        %817 = vmatmul.mubr.f32.gmra.mrb[0].mxu0 %v734
        %v818 = vpop.f32.mrb[0].mxu0
        %v819 = vadd.f32 0.0, %v818
        %v820 = vpop.f32.mrb[0].mxu0
        %821 = vmatprep.mubr.f32.mxu0 0.0
        %822 = vmatmul.mubr.f32.gmra.mrb[0].mxu0 %v735
        %v823 = vpop.f32.mrb[0].mxu0
        %v824 = vadd.f32 0.0, %v823
        %v825 = vpop.f32.mrb[0].mxu0
        %826 = vdwg.mxu0
        %v827 = vadd.f32 %v732, %v819
        %v828 = vadd.f32 %v732, %v824
        %v829 = vld [vmem:[#allocation3 + $0x7] sm:$0xff]
        %v830 = vld [vmem:[#allocation3 + $0xf] sm:$0xff]
        %s831 = scalar_lea.vmem [#allocation6], 128
        %v832 = vld [vmem:[%s831] sm:$0xff]
        %v833 = vld [vmem:[%s831 + $0x8] sm:$0xff]
        %v834 = vld [vmem:[%s831 + $0x10] sm:$0xff]
        %v835 = vld [vmem:[%s831 + $0x18] sm:$0xff]
        %v836 = vld [vmem:[%s831 + $0x20] sm:$0xff]
        %v837 = vld [vmem:[%s831 + $0x28] sm:$0xff]
        %v838 = vld [vmem:[%s831 + $0x30] sm:$0xff]
        %v839 = vld [vmem:[%s831 + $0x38] sm:$0xff]
        %v840 = vld [vmem:[%s831 + $0x40] sm:$0xff]
        %v841 = vld [vmem:[%s831 + $0x48] sm:$0xff]
        %v842 = vld [vmem:[%s831 + $0x50] sm:$0xff]
        %v843 = vld [vmem:[%s831 + $0x58] sm:$0xff]
        %v844 = vld [vmem:[%s831 + $0x60] sm:$0xff]
        %v845 = vld [vmem:[%s831 + $0x68] sm:$0xff]
        %v846 = vld [vmem:[%s831 + $0x70] sm:$0xff]
        %v847 = vld [vmem:[%s831 + $0x78] sm:$0xff]
        %848 = vmatprep.subr.mxu0 0.0
        %849 = vmatpush1.msra.mxu0 %v832
        %850 = vmatprep.subr.mxu0 0.0
        %851 = vmatpush1.msra.mxu0 %v833
        %852 = vmatprep.subr.mxu0 0.0
        %853 = vmatpush1.msra.mxu0 %v834
        %854 = vmatprep.subr.mxu0 0.0
        %855 = vmatpush1.msra.mxu0 %v835
        %856 = vmatprep.subr.mxu0 0.0
        %857 = vmatpush1.msra.mxu0 %v836
        %858 = vmatprep.subr.mxu0 0.0
        %859 = vmatpush1.msra.mxu0 %v837
        %860 = vmatprep.subr.mxu0 0.0
        %861 = vmatpush1.msra.mxu0 %v838
        %862 = vmatprep.subr.mxu0 0.0
        %863 = vmatpush1.msra.mxu0 %v839
        %864 = vmatprep.subr.mxu0 0.0
        %865 = vmatpush1.msra.mxu0 %v840
        %866 = vmatprep.subr.mxu0 0.0
        %867 = vmatpush1.msra.mxu0 %v841
        %868 = vmatprep.subr.mxu0 0.0
        %869 = vmatpush1.msra.mxu0 %v842
        %870 = vmatprep.subr.mxu0 0.0
        %871 = vmatpush1.msra.mxu0 %v843
        %872 = vmatprep.subr.mxu0 0.0
        %873 = vmatpush1.msra.mxu0 %v844
        %874 = vmatprep.subr.mxu0 0.0
        %875 = vmatpush1.msra.mxu0 %v845
        %876 = vmatprep.subr.mxu0 0.0
        %877 = vmatpush1.msra.mxu0 %v846
        %878 = vmatprep.subr.mxu0 0.0
        %879 = vmatpush1.msra.mxu0 %v847
        %880 = vmatprep.subr.mxu0 0.0
        %881 = vmatpush1.msra.mxu0 0.0
        %882 = vmatprep.subr.mxu0 0.0
        %883 = vmatpush1.msra.mxu0 0.0
        %884 = vmatprep.subr.mxu0 0.0
        %885 = vmatpush1.msra.mxu0 0.0
        %886 = vmatprep.subr.mxu0 0.0
        %887 = vmatpush1.msra.mxu0 0.0
        %888 = vmatprep.subr.mxu0 0.0
        %889 = vmatpush1.msra.mxu0 0.0
        %890 = vmatprep.subr.mxu0 0.0
        %891 = vmatpush1.msra.mxu0 0.0
        %892 = vmatprep.subr.mxu0 0.0
        %893 = vmatpush1.msra.mxu0 0.0
        %894 = vmatprep.subr.mxu0 0.0
        %895 = vmatpush1.msra.mxu0 0.0
        %896 = vmatprep.subr.mxu0 0.0
        %897 = vmatpush1.msra.mxu0 0.0
        %898 = vmatprep.subr.mxu0 0.0
        %899 = vmatpush1.msra.mxu0 0.0
        %900 = vmatprep.subr.mxu0 0.0
        %901 = vmatpush1.msra.mxu0 0.0
        %902 = vmatprep.subr.mxu0 0.0
        %903 = vmatpush1.msra.mxu0 0.0
        %904 = vmatprep.subr.mxu0 0.0
        %905 = vmatpush1.msra.mxu0 0.0
        %906 = vmatprep.subr.mxu0 0.0
        %907 = vmatpush1.msra.mxu0 0.0
        %908 = vmatprep.subr.mxu0 0.0
        %909 = vmatpush1.msra.mxu0 0.0
        %910 = vmatprep.subr.mxu0 0.0
        %911 = vmatpush1.msra.mxu0 0.0
        %912 = vmatprep.mubr.f32.mxu0 0.0
        %913 = vmatmul.mubr.f32.gmra.mrb[0].mxu0 %v829
        %v914 = vpop.f32.mrb[0].mxu0
        %v915 = vadd.f32 0.0, %v914
        %v916 = vpop.f32.mrb[0].mxu0
        %917 = vmatprep.mubr.f32.mxu0 0.0
        %918 = vmatmul.mubr.f32.gmra.mrb[0].mxu0 %v830
        %v919 = vpop.f32.mrb[0].mxu0
        %v920 = vadd.f32 0.0, %v919
        %v921 = vpop.f32.mrb[0].mxu0
        %922 = vdwg.mxu0
        %v923 = vadd.f32 %v827, %v915
        %v924 = vadd.f32 %v828, %v920
        %v925 = vld [vmem:[#allocation3 + $0x8] sm:$0xff]
        %v926 = vld [vmem:[#allocation3 + $0x10] sm:$0xff]
        %s927 = scalar_lea.vmem [#allocation6], 256
        %v928 = vld [vmem:[%s927] sm:$0xff]
        %v929 = vld [vmem:[%s927 + $0x8] sm:$0xff]
        %v930 = vld [vmem:[%s927 + $0x10] sm:$0xff]
        %v931 = vld [vmem:[%s927 + $0x18] sm:$0xff]
        %v932 = vld [vmem:[%s927 + $0x20] sm:$0xff]
        %v933 = vld [vmem:[%s927 + $0x28] sm:$0xff]
        %v934 = vld [vmem:[%s927 + $0x30] sm:$0xff]
        %v935 = vld [vmem:[%s927 + $0x38] sm:$0xff]
        %v936 = vld [vmem:[%s927 + $0x40] sm:$0xff]
        %v937 = vld [vmem:[%s927 + $0x48] sm:$0xff]
        %v938 = vld [vmem:[%s927 + $0x50] sm:$0xff]
        %v939 = vld [vmem:[%s927 + $0x58] sm:$0xff]
        %v940 = vld [vmem:[%s927 + $0x60] sm:$0xff]
        %v941 = vld [vmem:[%s927 + $0x68] sm:$0xff]
        %v942 = vld [vmem:[%s927 + $0x70] sm:$0xff]
        %v943 = vld [vmem:[%s927 + $0x78] sm:$0xff]
        %944 = vmatprep.subr.mxu0 0.0
        %945 = vmatpush1.msra.mxu0 %v928
        %946 = vmatprep.subr.mxu0 0.0
        %947 = vmatpush1.msra.mxu0 %v929
        %948 = vmatprep.subr.mxu0 0.0
        %949 = vmatpush1.msra.mxu0 %v930
        %950 = vmatprep.subr.mxu0 0.0
        %951 = vmatpush1.msra.mxu0 %v931
        %952 = vmatprep.subr.mxu0 0.0
        %953 = vmatpush1.msra.mxu0 %v932
        %954 = vmatprep.subr.mxu0 0.0
        %955 = vmatpush1.msra.mxu0 %v933
        %956 = vmatprep.subr.mxu0 0.0
        %957 = vmatpush1.msra.mxu0 %v934
        %958 = vmatprep.subr.mxu0 0.0
        %959 = vmatpush1.msra.mxu0 %v935
        %960 = vmatprep.subr.mxu0 0.0
        %961 = vmatpush1.msra.mxu0 %v936
        %962 = vmatprep.subr.mxu0 0.0
        %963 = vmatpush1.msra.mxu0 %v937
        %964 = vmatprep.subr.mxu0 0.0
        %965 = vmatpush1.msra.mxu0 %v938
        %966 = vmatprep.subr.mxu0 0.0
        %967 = vmatpush1.msra.mxu0 %v939
        %968 = vmatprep.subr.mxu0 0.0
        %969 = vmatpush1.msra.mxu0 %v940
        %970 = vmatprep.subr.mxu0 0.0
        %971 = vmatpush1.msra.mxu0 %v941
        %972 = vmatprep.subr.mxu0 0.0
        %973 = vmatpush1.msra.mxu0 %v942
        %974 = vmatprep.subr.mxu0 0.0
        %975 = vmatpush1.msra.mxu0 %v943
        %976 = vmatprep.subr.mxu0 0.0
        %977 = vmatpush1.msra.mxu0 0.0
        %978 = vmatprep.subr.mxu0 0.0
        %979 = vmatpush1.msra.mxu0 0.0
        %980 = vmatprep.subr.mxu0 0.0
        %981 = vmatpush1.msra.mxu0 0.0
        %982 = vmatprep.subr.mxu0 0.0
        %983 = vmatpush1.msra.mxu0 0.0
        %984 = vmatprep.subr.mxu0 0.0
        %985 = vmatpush1.msra.mxu0 0.0
        %986 = vmatprep.subr.mxu0 0.0
        %987 = vmatpush1.msra.mxu0 0.0
        %988 = vmatprep.subr.mxu0 0.0
        %989 = vmatpush1.msra.mxu0 0.0
        %990 = vmatprep.subr.mxu0 0.0
        %991 = vmatpush1.msra.mxu0 0.0
        %992 = vmatprep.subr.mxu0 0.0
        %993 = vmatpush1.msra.mxu0 0.0
        %994 = vmatprep.subr.mxu0 0.0
        %995 = vmatpush1.msra.mxu0 0.0
        %996 = vmatprep.subr.mxu0 0.0
        %997 = vmatpush1.msra.mxu0 0.0
        %998 = vmatprep.subr.mxu0 0.0
        %999 = vmatpush1.msra.mxu0 0.0
        %1000 = vmatprep.subr.mxu0 0.0
        %1001 = vmatpush1.msra.mxu0 0.0
        %1002 = vmatprep.subr.mxu0 0.0
        %1003 = vmatpush1.msra.mxu0 0.0
        %1004 = vmatprep.subr.mxu0 0.0
        %1005 = vmatpush1.msra.mxu0 0.0
        %1006 = vmatprep.subr.mxu0 0.0
        %1007 = vmatpush1.msra.mxu0 0.0
        %1008 = vmatprep.mubr.f32.mxu0 0.0
        %1009 = vmatmul.mubr.f32.gmra.mrb[0].mxu0 %v925
        %v1010 = vpop.f32.mrb[0].mxu0
        %v1011 = vadd.f32 0.0, %v1010
        %v1012 = vpop.f32.mrb[0].mxu0
        %1013 = vmatprep.mubr.f32.mxu0 0.0
        %1014 = vmatmul.mubr.f32.gmra.mrb[0].mxu0 %v926
        %v1015 = vpop.f32.mrb[0].mxu0
        %v1016 = vadd.f32 0.0, %v1015
        %v1017 = vpop.f32.mrb[0].mxu0
        %1018 = vdwg.mxu0
        %v1019 = vadd.f32 %v923, %v1011
        %v1020 = vadd.f32 %v924, %v1016
        %v1021 = vmax.f32 %v1019, 0.0
        %v1022 = vmax.f32 %v1020, 0.0
        %v1023 = vadd.f32 %v1021, %v719
        %v1024 = vadd.f32 %v1022, %v724
        %v1025 = vmax.f32 %v1023, 0.0
        %v1026 = vmax.f32 %v1024, 0.0
        %1027 = vst [vmem:[%s322] sm:$0xff] %v1025
        %1028 = vst [vmem:[%s322 + $0x8] sm:$0xff] %v1026
        %p1029 = scmp.lt.s32.totalorder %s20, 1
        %s1030 = scalar_select %p1029, %s20, 1
        %s1031 = smul.addr %s1030, 2
        %s1032 = smul.addr %s1031, 8
        %s1033 = scalar_lea.vmem %s7, %s1032
        // Predicated region
        $region61: #{tcn_encoder_forward.2} parent=47 // pred_check
          %p1034 = pneg %p190
        $region62: #{tcn_encoder_forward.2} parent=47 // pred_check_branch
          %1036 = sbr.rel (%p1034) target = $region64
        $region63: #{tcn_encoder_forward.2} parent=47 // pred_region
          _
        $region64: #{tcn_encoder_forward.2} parent=47 // pred_fallthru
          _
      $region48: #{tcn_encoder_forward.2} parent=5 // pred_fallthru
        _
      %p1037 = scmp.le.s32.totalorder 2, %s15
      // Predicated region
      $region65: #{tcn_encoder_forward.2} parent=5 // pred_check
        %p1038 = pneg %p1037
      $region66: #{tcn_encoder_forward.2} parent=5 // pred_check_branch
        %1040 = sbr.rel (%p1038) target = $region68
      $region67: #{tcn_encoder_forward.2} parent=5 // pred_region
        %s1041 = ssub.s32 %s15, 2
        // Predicated region
        $region69: #{tcn_encoder_forward.2} parent=67 // pred_check
          %p1042 = pneg %p196
        $region70: #{tcn_encoder_forward.2} parent=67 // pred_check_branch
          %1044 = sbr.rel (%p1042) target = $region72
        $region71: #{tcn_encoder_forward.2} parent=67 // pred_region
          %p1045 = scmp.lt.s32.totalorder %s21, 1
          %s1046 = scalar_select %p1045, %s21, 1
          %s1047 = smul.addr %s1046, 2
          %s1048 = smul.addr %s1047, 8
          %s1049 = scalar_lea.vmem %s7, %s1048
        $region72: #{tcn_encoder_forward.2} parent=67 // pred_fallthru
          _
      $region68: #{tcn_encoder_forward.2} parent=5 // pred_fallthru
        _
    $region6: #{tcn_encoder_forward.2} parent=1 // loop_footer
      %s19 = sadd.s32 1, %s15
    $region7: #{tcn_encoder_forward.2} parent=1 // loop_footer_branch
      %14 = sbr.rel target = $region3
    $region8: #{tcn_encoder_forward.2} parent=1 // loop_exit
      _
    %1050 = vsyncpa [#allocation5], 1
    %s1051 = scalar_lea.sflag [#allocation5], 1
    %1052 = vsyncpa %s1051, 1
    %1053 = vsyncpa [#allocation7], 1

</llo_original>
